<compile_context>
chip_gen: v7x
topology: tpu7x:2x2x1
jax: 0.10.0
libtpu: 0.0.40
codegen_flags: <defaults>
</compile_context>

<pallas_src>
import functools

import jax
import jax.numpy as jnp
from jax.experimental import pallas as pl
from jax.experimental.pallas import tpu as pltpu

EPS = 1e-5


def _fused_kernel(x_ref, w_ref, g_ref, b_ref, res_ref, o_ref):
    # x_ref:   (Cin,  M)   f32 -- conv input, channels on sublanes, positions on lanes
    # w_ref:   (Cblk, Cin) f32 -- 1x1 conv weight block (rows = this core's out channels)
    # g_ref:   (Cblk, 1)   f32 -- gamma
    # b_ref:   (Cblk, 1)   f32 -- beta
    # res_ref: (Cblk, M)   f32 -- residual (x105) block
    # o_ref:   (Cblk, M)   f32
    x = x_ref[...]
    w = w_ref[...]

    # 1x1 conv == matmul on the MXU, directly in (C, M) layout.
    y = jnp.dot(w, x, preferred_element_type=jnp.float32)  # (Cblk, M)

    # Training-mode BN statistics over the M axis (== N*H*W) per channel.
    # Two-pass (y - mean)^2 form: y is fully resident, so the second VPU pass
    # is essentially free and avoids catastrophic cancellation.
    m = y.shape[1]
    inv_m = 1.0 / m
    mean = jnp.sum(y, axis=1, keepdims=True) * inv_m          # (Cblk, 1)
    centered = y - mean                                       # (Cblk, M)
    var = jnp.sum(centered * centered, axis=1, keepdims=True) * inv_m

    scale = g_ref[...] * jax.lax.rsqrt(var + EPS)             # (Cblk, 1)

    # Fused normalize + affine + residual add (single traversal of y).
    o_ref[...] = res_ref[...] + centered * scale + b_ref[...]


def _as_2d_weight(weight):
    if weight.ndim == 4:  # (Cout, Cin, 1, 1) -> (Cout, Cin), metadata-only
        return weight.reshape(weight.shape[0], weight.shape[1])
    return weight


def _num_cout_blocks(c_out):
    """Split Cout across TensorCores only on chips with 2 TCs (v7x)."""
    try:
        kind = jax.devices()[0].device_kind.lower()
    except Exception:  # pragma: no cover - defensive
        kind = ""
    if ("v7" in kind or "tpu7" in kind or "7x" in kind) and c_out % 16 == 0:
        return 2
    return 1


@functools.partial(jax.jit, donate_argnums=(1,))
def conv_bn_add(x117, x105, weight, gamma, beta):
    """x117, x105: (N, C, H, W) f32. weight: (Cout, Cin[,1,1]) f32. gamma/beta: (Cout,) f32."""
    n, c_in, h, w = x117.shape
    weight = _as_2d_weight(weight)
    c_out = weight.shape[0]
    m = n * h * w

    # NCHW -> (C, M). For N == 1 this is a pure reshape (no data movement).
    if n == 1:
        x_mat = x117.reshape(c_in, m)
        r_mat = x105.reshape(c_out, m)
    else:
        x_mat = jnp.transpose(x117, (1, 0, 2, 3)).reshape(c_in, m)
        r_mat = jnp.transpose(x105, (1, 0, 2, 3)).reshape(c_out, m)

    # Metadata-only reshapes (no host-side stack / extra XLA op).
    g2 = gamma.reshape(c_out, 1)
    b2 = beta.reshape(c_out, 1)

    blocks = _num_cout_blocks(c_out)
    cb = c_out // blocks

    cost = pl.CostEstimate(
        flops=2 * c_out * c_in * m + 8 * c_out * m,
        transcendentals=c_out,
        bytes_accessed=4 * (c_in * m + 2 * c_out * m + c_out * c_in + 2 * c_out),
    )

    out_mat = pl.pallas_call(
        _fused_kernel,
        out_shape=jax.ShapeDtypeStruct((c_out, m), jnp.float32),
        grid=(blocks,),
        in_specs=[
            pl.BlockSpec((c_in, m), lambda i: (0, 0),
                         memory_space=pltpu.MemorySpace.VMEM),
            pl.BlockSpec((cb, c_in), lambda i: (i, 0),
                         memory_space=pltpu.MemorySpace.VMEM),
            pl.BlockSpec((cb, 1), lambda i: (i, 0),
                         memory_space=pltpu.MemorySpace.VMEM),
            pl.BlockSpec((cb, 1), lambda i: (i, 0),
                         memory_space=pltpu.MemorySpace.VMEM),
            pl.BlockSpec((cb, m), lambda i: (i, 0),
                         memory_space=pltpu.MemorySpace.VMEM),
        ],
        out_specs=pl.BlockSpec((cb, m), lambda i: (i, 0),
                               memory_space=pltpu.MemorySpace.VMEM),
        input_output_aliases={4: 0},  # residual buffer reused as output
        cost_estimate=cost,
        compiler_params=pltpu.CompilerParams(
            dimension_semantics=("parallel",),
        ),
    )(x_mat, weight, g2, b2, r_mat)

    # (C, M) -> NCHW (pure reshape for N == 1).
    if n == 1:
        return out_mat.reshape(1, c_out, h, w)
    return jnp.transpose(out_mat.reshape(c_out, n, h, w), (1, 0, 2, 3))


def reference(x117, x105, weight, gamma, beta):
    """Pure-JAX reference implementing the same training-mode conv + BN + add."""
    n, c_in, h, w = x117.shape
    weight = _as_2d_weight(weight)
    c_out = weight.shape[0]
    x_mat = jnp.transpose(x117, (0, 2, 3, 1)).reshape(-1, c_in)
    y = x_mat @ weight.T
    mean = jnp.mean(y, axis=0, keepdims=True)
    var = jnp.mean((y - mean) ** 2, axis=0, keepdims=True)
    y_norm = (y - mean) / jnp.sqrt(var + EPS) * gamma[None, :] + beta[None, :]
    out = jnp.transpose(y_norm.reshape(n, h, w, c_out), (0, 3, 1, 2))
    return x105 + out


if __name__ == "__main__":
    key = jax.random.PRNGKey(0)
    k1, k2, k3 = jax.random.split(key, 3)

    # Module-fixed shapes: Conv2d(320, 320, 1x1, bias=False), 14x14 spatial, N=1.
    N, C, H, W = 1, 320, 14, 14

    x117 = jax.random.normal(k1, (N, C, H, W), dtype=jnp.float32)
    x105 = jax.random.normal(k2, (N, C, H, W), dtype=jnp.float32)

    # Conv weight (Cout, Cin, 1, 1); BatchNorm2d default affine init.
    weight = jax.random.normal(k3, (C, C, 1, 1), dtype=jnp.float32) * (1.0 / jnp.sqrt(C))
    gamma = jnp.ones((C,), dtype=jnp.float32)
    beta = jnp.zeros((C,), dtype=jnp.float32)

    # Compute the reference BEFORE the kernel call: the kernel donates x105's
    # buffer (it is aliased to the output).
    ref = jax.block_until_ready(reference(x117, x105, weight, gamma, beta))

    out = conv_bn_add(x117, x105, weight, gamma, beta)
    out = jax.block_until_ready(out)

    assert out.shape == (N, C, H, W)
    assert jnp.allclose(out, ref, atol=1e-4, rtol=1e-4), "mismatch vs reference"

    print("KERNEL_OK")
</pallas_src>

<mosaic_0001>
module attributes {stable_mosaic.version = 11 : i64} {
  func.func @_fused_kernel(%arg0: i32, %arg1: memref<320x196xf32, #tpu.memory_space<vmem>>, %arg2: memref<320x320xf32, #tpu.memory_space<vmem>>, %arg3: memref<320x1xf32, #tpu.memory_space<vmem>>, %arg4: memref<320x1xf32, #tpu.memory_space<vmem>>, %arg5: memref<320x196xf32, #tpu.memory_space<vmem>>, %arg6: memref<320x196xf32, #tpu.memory_space<vmem>>) attributes {dimension_semantics = [#tpu.dimension_semantics<parallel>], iteration_bounds = array<i64: 1>, scalar_prefetch = 0 : i64, scratch_operands = 0 : i64, tpu.core_type = #tpu.core_type<tc>, window_params = [{pipeline_mode = #tpu.pipeline_mode<synchronous>, transform_indices = @transform_0, window_bounds = array<i64: 320, 196>}, {transform_indices = @transform_1, window_bounds = array<i64: 320, 320>}, {transform_indices = @transform_2, window_bounds = array<i64: 320, 1>}, {transform_indices = @transform_3, window_bounds = array<i64: 320, 1>}, {transform_indices = @transform_4, window_bounds = array<i64: 320, 196>}, {transform_indices = @transform_5, window_bounds = array<i64: 320, 196>}]} {
    %c0 = arith.constant 0 : index
    %c0_0 = arith.constant 0 : index
    %0 = vector.load %arg1[%c0, %c0_0] : memref<320x196xf32, #tpu.memory_space<vmem>>, vector<320x196xf32>
    %c0_1 = arith.constant 0 : index
    %c0_2 = arith.constant 0 : index
    %1 = vector.load %arg2[%c0_1, %c0_2] : memref<320x320xf32, #tpu.memory_space<vmem>>, vector<320x320xf32>
    %cst = arith.constant dense<0.000000e+00> : vector<320x196xf32>
    %2 = tpu.matmul %1, %0, %cst {dimension_numbers = #tpu.dot_dimension_numbers<[1], [0], [0], [1], [0, 0, 1, 1], [], []>} : vector<320x320xf32>, vector<320x196xf32>, vector<320x196xf32> -> vector<320x196xf32>
    %cst_3 = arith.constant dense<0.000000e+00> : vector<320xf32>
    %3 = vector.multi_reduction <add>, %2, %cst_3 [1] : vector<320x196xf32> to vector<320xf32>
    %4 = vector.shape_cast %3 : vector<320xf32> to vector<320x1xf32>
    %cst_4 = arith.constant 0.00510204071 : f32
    %5 = vector.broadcast %cst_4 : f32 to vector<320x1xf32>
    %6 = arith.mulf %4, %5 : vector<320x1xf32>
    %7 = vector.broadcast %6 : vector<320x1xf32> to vector<320x196xf32>
    %8 = arith.subf %2, %7 : vector<320x196xf32>
    %9 = arith.mulf %8, %8 : vector<320x196xf32>
    %cst_5 = arith.constant dense<0.000000e+00> : vector<320xf32>
    %10 = vector.multi_reduction <add>, %9, %cst_5 [1] : vector<320x196xf32> to vector<320xf32>
    %11 = vector.shape_cast %10 : vector<320xf32> to vector<320x1xf32>
    %cst_6 = arith.constant 0.00510204071 : f32
    %12 = vector.broadcast %cst_6 : f32 to vector<320x1xf32>
    %13 = arith.mulf %11, %12 : vector<320x1xf32>
    %c0_7 = arith.constant 0 : index
    %c0_8 = arith.constant 0 : index
    %14 = vector.load %arg3[%c0_7, %c0_8] : memref<320x1xf32, #tpu.memory_space<vmem>>, vector<320x1xf32>
    %cst_9 = arith.constant 9.99999974E-6 : f32
    %15 = vector.broadcast %cst_9 : f32 to vector<320x1xf32>
    %16 = arith.addf %13, %15 : vector<320x1xf32>
    %17 = math.rsqrt %16 : vector<320x1xf32>
    %18 = arith.mulf %14, %17 : vector<320x1xf32>
    %c0_10 = arith.constant 0 : index
    %c0_11 = arith.constant 0 : index
    %19 = vector.load %arg5[%c0_10, %c0_11] : memref<320x196xf32, #tpu.memory_space<vmem>>, vector<320x196xf32>
    %20 = vector.broadcast %18 : vector<320x1xf32> to vector<320x196xf32>
    %21 = arith.mulf %8, %20 : vector<320x196xf32>
    %22 = arith.addf %19, %21 : vector<320x196xf32>
    %c0_12 = arith.constant 0 : index
    %c0_13 = arith.constant 0 : index
    %23 = vector.load %arg4[%c0_12, %c0_13] : memref<320x1xf32, #tpu.memory_space<vmem>>, vector<320x1xf32>
    %24 = vector.broadcast %23 : vector<320x1xf32> to vector<320x196xf32>
    %25 = arith.addf %22, %24 : vector<320x196xf32>
    %c0_14 = arith.constant 0 : index
    %c0_15 = arith.constant 0 : index
    %26 = vector.load %arg6[%c0_14, %c0_15] : memref<320x196xf32, #tpu.memory_space<vmem>>, vector<320x196xf32>
    tpu.vector_store %arg6[%c0_14, %c0_15], %25 {strides = array<i32>} : memref<320x196xf32, #tpu.memory_space<vmem>>, vector<320x196xf32>,
    return
  }
  func.func @transform_0(%arg0: i32) -> (i32, i32) {
    %c0_i32 = arith.constant 0 : i32
    %c0_i32_0 = arith.constant 0 : i32
    %c0_i32_1 = arith.constant 0 : i32
    return %c0_i32, %c0_i32_0 : i32, i32
  }
  func.func @transform_1(%arg0: i32) -> (i32, i32) {
    %c0_i32 = arith.constant 0 : i32
    %c0_i32_0 = arith.constant 0 : i32
    return %arg0, %c0_i32 : i32, i32
  }
  func.func @transform_2(%arg0: i32) -> (i32, i32) {
    %c0_i32 = arith.constant 0 : i32
    %c0_i32_0 = arith.constant 0 : i32
    return %arg0, %c0_i32 : i32, i32
  }
  func.func @transform_3(%arg0: i32) -> (i32, i32) {
    %c0_i32 = arith.constant 0 : i32
    %c0_i32_0 = arith.constant 0 : i32
    return %arg0, %c0_i32 : i32, i32
  }
  func.func @transform_4(%arg0: i32) -> (i32, i32) {
    %c0_i32 = arith.constant 0 : i32
    %c0_i32_0 = arith.constant 0 : i32
    return %arg0, %c0_i32 : i32, i32
  }
  func.func @transform_5(%arg0: i32) -> (i32, i32) {
    %c0_i32 = arith.constant 0 : i32
    %c0_i32_0 = arith.constant 0 : i32
    return %arg0, %c0_i32 : i32, i32
  }
}

</mosaic_0001>

<llo_original>
// kernel: conv_bn_add.1
$region0: #{conv_bn_add.1}
  #allocation0 [shape = 'u32[]', space=smem, size = 0x4, offset = 0x4, fixed_abs, tag = 'smem constant byte address 0x4 - core index']
  #allocation1 [shape = 'u32[144,128]{1,0:T(1,128)}', space=vmem, size = 0x12000, scoped, tag = 'internal scratch']
  %s0 = inlined_call_operand.vmem [shape: f32[320,196], index: 0, kind: input, shape index: {}]
  %s1 = inlined_call_operand.vmem [shape: f32[320,320], index: 1, kind: input, shape index: {}]
  %s2 = inlined_call_operand.vmem [shape: f32[320,1], index: 2, kind: input, shape index: {}]
  %s3 = inlined_call_operand.vmem [shape: f32[320,1], index: 3, kind: input, shape index: {}]
  %s4 = inlined_call_operand.vmem [shape: f32[320,196], index: 4, kind: input, shape index: {}, may-alias: {4,5}]
  %s5 = inlined_call_operand.vmem [shape: f32[320,196], index: 5, kind: output, shape index: {}, may-alias: {4,5}]
  %s6 = sld [smem:[#allocation0]]
  $region30: #{conv_bn_add.1} parent=0
    _
  %s8 = ssub.s32 1, %s6
  %s9 = scalar_select 0, %s8, %s6
  // Predicated region
  $region2: #{conv_bn_add.1} parent=0 // pred_check
    _
  $region3: #{conv_bn_add.1} parent=0 // pred_check_branch
    %11 = sbr.rel (0) target = $region5
  $region4: #{conv_bn_add.1} parent=0 // pred_region
    _
  $region5: #{conv_bn_add.1} parent=0 // pred_fallthru
    _
  // Predicated region
  $region6: #{conv_bn_add.1} parent=0 // pred_check
    _
  $region7: #{conv_bn_add.1} parent=0 // pred_check_branch
    %13 = sbr.rel (0) target = $region9
  $region8: #{conv_bn_add.1} parent=0 // pred_region
    _
  $region9: #{conv_bn_add.1} parent=0 // pred_fallthru
    _
  // Predicated region
  $region10: #{conv_bn_add.1} parent=0 // pred_check
    _
  $region11: #{conv_bn_add.1} parent=0 // pred_check_branch
    %15 = sbr.rel (0) target = $region13
  $region12: #{conv_bn_add.1} parent=0 // pred_region
    _
  $region13: #{conv_bn_add.1} parent=0 // pred_fallthru
    _
  // Predicated region
  $region14: #{conv_bn_add.1} parent=0 // pred_check
    _
  $region15: #{conv_bn_add.1} parent=0 // pred_check_branch
    %17 = sbr.rel (0) target = $region17
  $region16: #{conv_bn_add.1} parent=0 // pred_region
    _
  $region17: #{conv_bn_add.1} parent=0 // pred_fallthru
    _
  // Predicated region
  $region18: #{conv_bn_add.1} parent=0 // pred_check
    _
  $region19: #{conv_bn_add.1} parent=0 // pred_check_branch
    %19 = sbr.rel (0) target = $region21
  $region20: #{conv_bn_add.1} parent=0 // pred_region
    _
  $region21: #{conv_bn_add.1} parent=0 // pred_fallthru
    _
  %v20 = vld [vmem:[%s0] sm:$0xff]
  %v21 = vld [vmem:[%s0 + $0x8] sm:$0xff]
  %v22 = vld [vmem:[%s0 + $0x10] sm:$0xff]
  %v23 = vld [vmem:[%s0 + $0x18] sm:$0xff]
  %v24 = vld [vmem:[%s0 + $0x20] sm:$0xff]
  %v25 = vld [vmem:[%s0 + $0x28] sm:$0xff]
  %v26 = vld [vmem:[%s0 + $0x30] sm:$0xff]
  %v27 = vld [vmem:[%s0 + $0x38] sm:$0xff]
  %v28 = vld [vmem:[%s0 + $0x40] sm:$0xff]
  %v29 = vld [vmem:[%s0 + $0x48] sm:$0xff]
  %v30 = vld [vmem:[%s0 + $0x50] sm:$0xff]
  %v31 = vld [vmem:[%s0 + $0x58] sm:$0xff]
  %v32 = vld [vmem:[%s0 + $0x60] sm:$0xff]
  %v33 = vld [vmem:[%s0 + $0x68] sm:$0xff]
  %v34 = vld [vmem:[%s0 + $0x70] sm:$0xff]
  %v35 = vld [vmem:[%s0 + $0x78] sm:$0xff]
  %v36 = vld [vmem:[%s0 + $0x80] sm:$0xff]
  %v37 = vld [vmem:[%s0 + $0x88] sm:$0xff]
  %v38 = vld [vmem:[%s0 + $0x90] sm:$0xff]
  %v39 = vld [vmem:[%s0 + $0x98] sm:$0xff]
  %v40 = vld [vmem:[%s0 + $0xa0] sm:$0xff]
  %v41 = vld [vmem:[%s0 + $0xa8] sm:$0xff]
  %v42 = vld [vmem:[%s0 + $0xb0] sm:$0xff]
  %v43 = vld [vmem:[%s0 + $0xb8] sm:$0xff]
  %v44 = vld [vmem:[%s0 + $0xc0] sm:$0xff]
  %v45 = vld [vmem:[%s0 + $0xc8] sm:$0xff]
  %v46 = vld [vmem:[%s0 + $0xd0] sm:$0xff]
  %v47 = vld [vmem:[%s0 + $0xd8] sm:$0xff]
  %v48 = vld [vmem:[%s0 + $0xe0] sm:$0xff]
  %v49 = vld [vmem:[%s0 + $0xe8] sm:$0xff]
  %v50 = vld [vmem:[%s0 + $0xf0] sm:$0xff]
  %v51 = vld [vmem:[%s0 + $0xf8] sm:$0xff]
  %v52 = vld [vmem:[%s0 + $0x100] sm:$0xff]
  %v53 = vld [vmem:[%s0 + $0x108] sm:$0xff]
  %v54 = vld [vmem:[%s0 + $0x110] sm:$0xff]
  %v55 = vld [vmem:[%s0 + $0x118] sm:$0xff]
  %v56 = vld [vmem:[%s0 + $0x120] sm:$0xff]
  %v57 = vld [vmem:[%s0 + $0x128] sm:$0xff]
  %v58 = vld [vmem:[%s0 + $0x130] sm:$0xff]
  %v59 = vld [vmem:[%s0 + $0x138] sm:$0xff]
  %v60 = vld [vmem:[%s0 + $0x140] sm:$0xff]
  %v61 = vld [vmem:[%s0 + $0x148] sm:$0xff]
  %v62 = vld [vmem:[%s0 + $0x150] sm:$0xff]
  %v63 = vld [vmem:[%s0 + $0x158] sm:$0xff]
  %v64 = vld [vmem:[%s0 + $0x160] sm:$0xff]
  %v65 = vld [vmem:[%s0 + $0x168] sm:$0xff]
  %v66 = vld [vmem:[%s0 + $0x170] sm:$0xff]
  %v67 = vld [vmem:[%s0 + $0x178] sm:$0xff]
  %v68 = vld [vmem:[%s0 + $0x180] sm:$0xff]
  %v69 = vld [vmem:[%s0 + $0x188] sm:$0xff]
  %v70 = vld [vmem:[%s0 + $0x190] sm:$0xff]
  %v71 = vld [vmem:[%s0 + $0x198] sm:$0xff]
  %v72 = vld [vmem:[%s0 + $0x1a0] sm:$0xff]
  %v73 = vld [vmem:[%s0 + $0x1a8] sm:$0xff]
  %v74 = vld [vmem:[%s0 + $0x1b0] sm:$0xff]
  %v75 = vld [vmem:[%s0 + $0x1b8] sm:$0xff]
  %v76 = vld [vmem:[%s0 + $0x1c0] sm:$0xff]
  %v77 = vld [vmem:[%s0 + $0x1c8] sm:$0xff]
  %v78 = vld [vmem:[%s0 + $0x1d0] sm:$0xff]
  %v79 = vld [vmem:[%s0 + $0x1d8] sm:$0xff]
  %v80 = vld [vmem:[%s0 + $0x1e0] sm:$0xff]
  %v81 = vld [vmem:[%s0 + $0x1e8] sm:$0xff]
  %v82 = vld [vmem:[%s0 + $0x1f0] sm:$0xff]
  %v83 = vld [vmem:[%s0 + $0x1f8] sm:$0xff]
  %v84 = vld [vmem:[%s0 + $0x200] sm:$0xff]
  %v85 = vld [vmem:[%s0 + $0x208] sm:$0xff]
  %v86 = vld [vmem:[%s0 + $0x210] sm:$0xff]
  %v87 = vld [vmem:[%s0 + $0x218] sm:$0xff]
  %v88 = vld [vmem:[%s0 + $0x220] sm:$0xff]
  %v89 = vld [vmem:[%s0 + $0x228] sm:$0xff]
  %v90 = vld [vmem:[%s0 + $0x230] sm:$0xff]
  %v91 = vld [vmem:[%s0 + $0x238] sm:$0xff]
  %v92 = vld [vmem:[%s0 + $0x240] sm:$0xff]
  %v93 = vld [vmem:[%s0 + $0x248] sm:$0xff]
  %v94 = vld [vmem:[%s0 + $0x250] sm:$0xff]
  %v95 = vld [vmem:[%s0 + $0x258] sm:$0xff]
  %v96 = vld [vmem:[%s0 + $0x260] sm:$0xff]
  %v97 = vld [vmem:[%s0 + $0x268] sm:$0xff]
  %v98 = vld [vmem:[%s0 + $0x270] sm:$0xff]
  %v99 = vld [vmem:[%s0 + $0x278] sm:$0xff]
  %v100 = vld [vmem:[%s1] sm:$0xff]
  %v101 = vld [vmem:[%s1 + $0x8] sm:$0xff]
  %v102 = vld [vmem:[%s1 + $0x10] sm:$0xff]
  %v103 = vld [vmem:[%s1 + $0x18] sm:$0xff]
  %v104 = vld [vmem:[%s1 + $0x20] sm:$0xff]
  %v105 = vld [vmem:[%s1 + $0x28] sm:$0xff]
  %v106 = vld [vmem:[%s1 + $0x30] sm:$0xff]
  %v107 = vld [vmem:[%s1 + $0x38] sm:$0xff]
  %v108 = vld [vmem:[%s1 + $0x40] sm:$0xff]
  %v109 = vld [vmem:[%s1 + $0x48] sm:$0xff]
  %v110 = vld [vmem:[%s1 + $0x50] sm:$0xff]
  %v111 = vld [vmem:[%s1 + $0x58] sm:$0xff]
  %v112 = vld [vmem:[%s1 + $0x60] sm:$0xff]
  %v113 = vld [vmem:[%s1 + $0x68] sm:$0xff]
  %v114 = vld [vmem:[%s1 + $0x70] sm:$0xff]
  %v115 = vld [vmem:[%s1 + $0x78] sm:$0xff]
  %v116 = vld [vmem:[%s1 + $0x80] sm:$0xff]
  %v117 = vld [vmem:[%s1 + $0x88] sm:$0xff]
  %v118 = vld [vmem:[%s1 + $0x90] sm:$0xff]
  %v119 = vld [vmem:[%s1 + $0x98] sm:$0xff]
  %v120 = vld [vmem:[%s1 + $0xa0] sm:$0xff]
  %v121 = vld [vmem:[%s1 + $0xa8] sm:$0xff]
  %v122 = vld [vmem:[%s1 + $0xb0] sm:$0xff]
  %v123 = vld [vmem:[%s1 + $0xb8] sm:$0xff]
  %v124 = vld [vmem:[%s1 + $0xc0] sm:$0xff]
  %v125 = vld [vmem:[%s1 + $0xc8] sm:$0xff]
  %v126 = vld [vmem:[%s1 + $0xd0] sm:$0xff]
  %v127 = vld [vmem:[%s1 + $0xd8] sm:$0xff]
  %v128 = vld [vmem:[%s1 + $0xe0] sm:$0xff]
  %v129 = vld [vmem:[%s1 + $0xe8] sm:$0xff]
  %v130 = vld [vmem:[%s1 + $0xf0] sm:$0xff]
  %v131 = vld [vmem:[%s1 + $0xf8] sm:$0xff]
  %v132 = vld [vmem:[%s1 + $0x100] sm:$0xff]
  %v133 = vld [vmem:[%s1 + $0x108] sm:$0xff]
  %v134 = vld [vmem:[%s1 + $0x110] sm:$0xff]
  %v135 = vld [vmem:[%s1 + $0x118] sm:$0xff]
  %v136 = vld [vmem:[%s1 + $0x120] sm:$0xff]
  %v137 = vld [vmem:[%s1 + $0x128] sm:$0xff]
  %v138 = vld [vmem:[%s1 + $0x130] sm:$0xff]
  %v139 = vld [vmem:[%s1 + $0x138] sm:$0xff]
  %v140 = vld [vmem:[%s1 + $0x140] sm:$0xff]
  %v141 = vld [vmem:[%s1 + $0x148] sm:$0xff]
  %v142 = vld [vmem:[%s1 + $0x150] sm:$0xff]
  %v143 = vld [vmem:[%s1 + $0x158] sm:$0xff]
  %v144 = vld [vmem:[%s1 + $0x160] sm:$0xff]
  %v145 = vld [vmem:[%s1 + $0x168] sm:$0xff]
  %v146 = vld [vmem:[%s1 + $0x170] sm:$0xff]
  %v147 = vld [vmem:[%s1 + $0x178] sm:$0xff]
  %v148 = vld [vmem:[%s1 + $0x180] sm:$0xff]
  %v149 = vld [vmem:[%s1 + $0x188] sm:$0xff]
  %v150 = vld [vmem:[%s1 + $0x190] sm:$0xff]
  %v151 = vld [vmem:[%s1 + $0x198] sm:$0xff]
  %v152 = vld [vmem:[%s1 + $0x1a0] sm:$0xff]
  %v153 = vld [vmem:[%s1 + $0x1a8] sm:$0xff]
  %v154 = vld [vmem:[%s1 + $0x1b0] sm:$0xff]
  %v155 = vld [vmem:[%s1 + $0x1b8] sm:$0xff]
  %v156 = vld [vmem:[%s1 + $0x1c0] sm:$0xff]
  %v157 = vld [vmem:[%s1 + $0x1c8] sm:$0xff]
  %v158 = vld [vmem:[%s1 + $0x1d0] sm:$0xff]
  %v159 = vld [vmem:[%s1 + $0x1d8] sm:$0xff]
  %v160 = vld [vmem:[%s1 + $0x1e0] sm:$0xff]
  %v161 = vld [vmem:[%s1 + $0x1e8] sm:$0xff]
  %v162 = vld [vmem:[%s1 + $0x1f0] sm:$0xff]
  %v163 = vld [vmem:[%s1 + $0x1f8] sm:$0xff]
  %v164 = vld [vmem:[%s1 + $0x200] sm:$0xff]
  %v165 = vld [vmem:[%s1 + $0x208] sm:$0xff]
  %v166 = vld [vmem:[%s1 + $0x210] sm:$0xff]
  %v167 = vld [vmem:[%s1 + $0x218] sm:$0xff]
  %v168 = vld [vmem:[%s1 + $0x220] sm:$0xff]
  %v169 = vld [vmem:[%s1 + $0x228] sm:$0xff]
  %v170 = vld [vmem:[%s1 + $0x230] sm:$0xff]
  %v171 = vld [vmem:[%s1 + $0x238] sm:$0xff]
  %v172 = vld [vmem:[%s1 + $0x240] sm:$0xff]
  %v173 = vld [vmem:[%s1 + $0x248] sm:$0xff]
  %v174 = vld [vmem:[%s1 + $0x250] sm:$0xff]
  %v175 = vld [vmem:[%s1 + $0x258] sm:$0xff]
  %v176 = vld [vmem:[%s1 + $0x260] sm:$0xff]
  %v177 = vld [vmem:[%s1 + $0x268] sm:$0xff]
  %v178 = vld [vmem:[%s1 + $0x270] sm:$0xff]
  %v179 = vld [vmem:[%s1 + $0x278] sm:$0xff]
  %v180 = vld [vmem:[%s1 + $0x280] sm:$0xff]
  %v181 = vld [vmem:[%s1 + $0x288] sm:$0xff]
  %v182 = vld [vmem:[%s1 + $0x290] sm:$0xff]
  %v183 = vld [vmem:[%s1 + $0x298] sm:$0xff]
  %v184 = vld [vmem:[%s1 + $0x2a0] sm:$0xff]
  %v185 = vld [vmem:[%s1 + $0x2a8] sm:$0xff]
  %v186 = vld [vmem:[%s1 + $0x2b0] sm:$0xff]
  %v187 = vld [vmem:[%s1 + $0x2b8] sm:$0xff]
  %v188 = vld [vmem:[%s1 + $0x2c0] sm:$0xff]
  %v189 = vld [vmem:[%s1 + $0x2c8] sm:$0xff]
  %v190 = vld [vmem:[%s1 + $0x2d0] sm:$0xff]
  %v191 = vld [vmem:[%s1 + $0x2d8] sm:$0xff]
  %v192 = vld [vmem:[%s1 + $0x2e0] sm:$0xff]
  %v193 = vld [vmem:[%s1 + $0x2e8] sm:$0xff]
  %v194 = vld [vmem:[%s1 + $0x2f0] sm:$0xff]
  %v195 = vld [vmem:[%s1 + $0x2f8] sm:$0xff]
  %v196 = vld [vmem:[%s1 + $0x300] sm:$0xff]
  %v197 = vld [vmem:[%s1 + $0x308] sm:$0xff]
  %v198 = vld [vmem:[%s1 + $0x310] sm:$0xff]
  %v199 = vld [vmem:[%s1 + $0x318] sm:$0xff]
  %v200 = vld [vmem:[%s1 + $0x320] sm:$0xff]
  %v201 = vld [vmem:[%s1 + $0x328] sm:$0xff]
  %v202 = vld [vmem:[%s1 + $0x330] sm:$0xff]
  %v203 = vld [vmem:[%s1 + $0x338] sm:$0xff]
  %v204 = vld [vmem:[%s1 + $0x340] sm:$0xff]
  %v205 = vld [vmem:[%s1 + $0x348] sm:$0xff]
  %v206 = vld [vmem:[%s1 + $0x350] sm:$0xff]
  %v207 = vld [vmem:[%s1 + $0x358] sm:$0xff]
  %v208 = vld [vmem:[%s1 + $0x360] sm:$0xff]
  %v209 = vld [vmem:[%s1 + $0x368] sm:$0xff]
  %v210 = vld [vmem:[%s1 + $0x370] sm:$0xff]
  %v211 = vld [vmem:[%s1 + $0x378] sm:$0xff]
  %v212 = vld [vmem:[%s1 + $0x380] sm:$0xff]
  %v213 = vld [vmem:[%s1 + $0x388] sm:$0xff]
  %v214 = vld [vmem:[%s1 + $0x390] sm:$0xff]
  %v215 = vld [vmem:[%s1 + $0x398] sm:$0xff]
  %v216 = vld [vmem:[%s1 + $0x3a0] sm:$0xff]
  %v217 = vld [vmem:[%s1 + $0x3a8] sm:$0xff]
  %v218 = vld [vmem:[%s1 + $0x3b0] sm:$0xff]
  %v219 = vld [vmem:[%s1 + $0x3b8] sm:$0xff]
  %vm220 = vcmask 523264
  %v222 = vsel %vm220, %v102, 0
  %v225 = vsel %vm220, %v105, 0
  %v228 = vsel %vm220, %v108, 0
  %v231 = vsel %vm220, %v111, 0
  %v234 = vsel %vm220, %v114, 0
  %v237 = vsel %vm220, %v117, 0
  %v240 = vsel %vm220, %v120, 0
  %v243 = vsel %vm220, %v123, 0
  %v246 = vsel %vm220, %v126, 0
  %v249 = vsel %vm220, %v129, 0
  %v252 = vsel %vm220, %v132, 0
  %v255 = vsel %vm220, %v135, 0
  %v258 = vsel %vm220, %v138, 0
  %v261 = vsel %vm220, %v141, 0
  %v264 = vsel %vm220, %v144, 0
  %v267 = vsel %vm220, %v147, 0
  %v270 = vsel %vm220, %v150, 0
  %v273 = vsel %vm220, %v153, 0
  %v276 = vsel %vm220, %v156, 0
  %v279 = vsel %vm220, %v159, 0
  %v282 = vsel %vm220, %v162, 0
  %v285 = vsel %vm220, %v165, 0
  %v288 = vsel %vm220, %v168, 0
  %v291 = vsel %vm220, %v171, 0
  %v294 = vsel %vm220, %v174, 0
  %v297 = vsel %vm220, %v177, 0
  %v300 = vsel %vm220, %v180, 0
  %v303 = vsel %vm220, %v183, 0
  %v306 = vsel %vm220, %v186, 0
  %v309 = vsel %vm220, %v189, 0
  %v312 = vsel %vm220, %v192, 0
  %v315 = vsel %vm220, %v195, 0
  %v318 = vsel %vm220, %v198, 0
  %v321 = vsel %vm220, %v201, 0
  %v324 = vsel %vm220, %v204, 0
  %v327 = vsel %vm220, %v207, 0
  %v330 = vsel %vm220, %v210, 0
  %v333 = vsel %vm220, %v213, 0
  %v336 = vsel %vm220, %v216, 0
  %v339 = vsel %vm220, %v219, 0
  %341 = vmatprep.subr.mxu0 %v21
  %342 = vmatpush1.msra.mxu0 %v20
  %343 = vmatprep.subr.mxu0 %v23
  %344 = vmatpush1.msra.mxu0 %v22
  %345 = vmatprep.subr.mxu0 %v25
  %346 = vmatpush1.msra.mxu0 %v24
  %347 = vmatprep.subr.mxu0 %v27
  %348 = vmatpush1.msra.mxu0 %v26
  %349 = vmatprep.subr.mxu0 %v29
  %350 = vmatpush1.msra.mxu0 %v28
  %351 = vmatprep.subr.mxu0 %v31
  %352 = vmatpush1.msra.mxu0 %v30
  %353 = vmatprep.subr.mxu0 %v33
  %354 = vmatpush1.msra.mxu0 %v32
  %355 = vmatprep.subr.mxu0 %v35
  %356 = vmatpush1.msra.mxu0 %v34
  %357 = vmatprep.subr.mxu0 %v37
  %358 = vmatpush1.msra.mxu0 %v36
  %359 = vmatprep.subr.mxu0 %v39
  %360 = vmatpush1.msra.mxu0 %v38
  %361 = vmatprep.subr.mxu0 %v41
  %362 = vmatpush1.msra.mxu0 %v40
  %363 = vmatprep.subr.mxu0 %v43
  %364 = vmatpush1.msra.mxu0 %v42
  %365 = vmatprep.subr.mxu0 %v45
  %366 = vmatpush1.msra.mxu0 %v44
  %367 = vmatprep.subr.mxu0 %v47
  %368 = vmatpush1.msra.mxu0 %v46
  %369 = vmatprep.subr.mxu0 %v49
  %370 = vmatpush1.msra.mxu0 %v48
  %371 = vmatprep.subr.mxu0 %v51
  %372 = vmatpush1.msra.mxu0 %v50
  %373 = vmatprep.subr.mxu0 %v53
  %374 = vmatpush1.msra.mxu0 %v52
  %375 = vmatprep.subr.mxu0 %v55
  %376 = vmatpush1.msra.mxu0 %v54
  %377 = vmatprep.subr.mxu0 %v57
  %378 = vmatpush1.msra.mxu0 %v56
  %379 = vmatprep.subr.mxu0 %v59
  %380 = vmatpush1.msra.mxu0 %v58
  %381 = vmatprep.subr.mxu0 %v61
  %382 = vmatpush1.msra.mxu0 %v60
  %383 = vmatprep.subr.mxu0 %v63
  %384 = vmatpush1.msra.mxu0 %v62
  %385 = vmatprep.subr.mxu0 %v65
  %386 = vmatpush1.msra.mxu0 %v64
  %387 = vmatprep.subr.mxu0 %v67
  %388 = vmatpush1.msra.mxu0 %v66
  %389 = vmatprep.subr.mxu0 %v69
  %390 = vmatpush1.msra.mxu0 %v68
  %391 = vmatprep.subr.mxu0 %v71
  %392 = vmatpush1.msra.mxu0 %v70
  %393 = vmatprep.subr.mxu0 %v73
  %394 = vmatpush1.msra.mxu0 %v72
  %395 = vmatprep.subr.mxu0 %v75
  %396 = vmatpush1.msra.mxu0 %v74
  %397 = vmatprep.subr.mxu0 %v77
  %398 = vmatpush1.msra.mxu0 %v76
  %399 = vmatprep.subr.mxu0 %v79
  %400 = vmatpush1.msra.mxu0 %v78
  %401 = vmatprep.subr.mxu0 %v81
  %402 = vmatpush1.msra.mxu0 %v80
  %403 = vmatprep.subr.mxu0 %v83
  %404 = vmatpush1.msra.mxu0 %v82
  %405 = vmatprep.mubr.f32.mxu0 %v101
  %406 = vmatmul.mubr.f32.gmra.mrb[0].mxu0 %v100
  %v407 = vpop.f32.mrb[0].mxu0
  %v408 = vadd.f32 0.0, %v407
  %v409 = vpop.f32.mrb[0].mxu0
  %v410 = vadd.f32 0.0, %v409
  %411 = vmatprep.mubr.f32.mxu0 %v104
  %412 = vmatmul.mubr.f32.gmra.mrb[0].mxu0 %v103
  %v413 = vpop.f32.mrb[0].mxu0
  %v414 = vadd.f32 0.0, %v413
  %v415 = vpop.f32.mrb[0].mxu0
  %v416 = vadd.f32 0.0, %v415
  %417 = vmatprep.mubr.f32.mxu0 %v107
  %418 = vmatmul.mubr.f32.gmra.mrb[0].mxu0 %v106
  %v419 = vpop.f32.mrb[0].mxu0
  %v420 = vadd.f32 0.0, %v419
  %v421 = vpop.f32.mrb[0].mxu0
  %v422 = vadd.f32 0.0, %v421
  %423 = vmatprep.mubr.f32.mxu0 %v110
  %424 = vmatmul.mubr.f32.gmra.mrb[0].mxu0 %v109
  %v425 = vpop.f32.mrb[0].mxu0
  %v426 = vadd.f32 0.0, %v425
  %v427 = vpop.f32.mrb[0].mxu0
  %v428 = vadd.f32 0.0, %v427
  %429 = vmatprep.mubr.f32.mxu0 %v113
  %430 = vmatmul.mubr.f32.gmra.mrb[0].mxu0 %v112
  %v431 = vpop.f32.mrb[0].mxu0
  %v432 = vadd.f32 0.0, %v431
  %v433 = vpop.f32.mrb[0].mxu0
  %v434 = vadd.f32 0.0, %v433
  %435 = vmatprep.mubr.f32.mxu0 %v116
  %436 = vmatmul.mubr.f32.gmra.mrb[0].mxu0 %v115
  %v437 = vpop.f32.mrb[0].mxu0
  %v438 = vadd.f32 0.0, %v437
  %v439 = vpop.f32.mrb[0].mxu0
  %v440 = vadd.f32 0.0, %v439
  %441 = vmatprep.mubr.f32.mxu0 %v119
  %442 = vmatmul.mubr.f32.gmra.mrb[0].mxu0 %v118
  %v443 = vpop.f32.mrb[0].mxu0
  %v444 = vadd.f32 0.0, %v443
  %v445 = vpop.f32.mrb[0].mxu0
  %v446 = vadd.f32 0.0, %v445
  %447 = vmatprep.mubr.f32.mxu0 %v122
  %448 = vmatmul.mubr.f32.gmra.mrb[0].mxu0 %v121
  %v449 = vpop.f32.mrb[0].mxu0
  %v450 = vadd.f32 0.0, %v449
  %v451 = vpop.f32.mrb[0].mxu0
  %v452 = vadd.f32 0.0, %v451
  %453 = vmatprep.mubr.f32.mxu0 %v125
  %454 = vmatmul.mubr.f32.gmra.mrb[0].mxu0 %v124
  %v455 = vpop.f32.mrb[0].mxu0
  %v456 = vadd.f32 0.0, %v455
  %v457 = vpop.f32.mrb[0].mxu0
  %v458 = vadd.f32 0.0, %v457
  %459 = vmatprep.mubr.f32.mxu0 %v128
  %460 = vmatmul.mubr.f32.gmra.mrb[0].mxu0 %v127
  %v461 = vpop.f32.mrb[0].mxu0
  %v462 = vadd.f32 0.0, %v461
  %v463 = vpop.f32.mrb[0].mxu0
  %v464 = vadd.f32 0.0, %v463
  %465 = vmatprep.mubr.f32.mxu0 %v131
  %466 = vmatmul.mubr.f32.gmra.mrb[0].mxu0 %v130
  %v467 = vpop.f32.mrb[0].mxu0
  %v468 = vadd.f32 0.0, %v467
  %v469 = vpop.f32.mrb[0].mxu0
  %v470 = vadd.f32 0.0, %v469
  %471 = vmatprep.mubr.f32.mxu0 %v134
  %472 = vmatmul.mubr.f32.gmra.mrb[0].mxu0 %v133
  %v473 = vpop.f32.mrb[0].mxu0
  %v474 = vadd.f32 0.0, %v473
  %v475 = vpop.f32.mrb[0].mxu0
  %v476 = vadd.f32 0.0, %v475
  %477 = vmatprep.mubr.f32.mxu0 %v137
  %478 = vmatmul.mubr.f32.gmra.mrb[0].mxu0 %v136
  %v479 = vpop.f32.mrb[0].mxu0
  %v480 = vadd.f32 0.0, %v479
  %v481 = vpop.f32.mrb[0].mxu0
  %v482 = vadd.f32 0.0, %v481
  %483 = vmatprep.mubr.f32.mxu0 %v140
  %484 = vmatmul.mubr.f32.gmra.mrb[0].mxu0 %v139
  %v485 = vpop.f32.mrb[0].mxu0
  %v486 = vadd.f32 0.0, %v485
  %v487 = vpop.f32.mrb[0].mxu0
  %v488 = vadd.f32 0.0, %v487
  %489 = vmatprep.mubr.f32.mxu0 %v143
  %490 = vmatmul.mubr.f32.gmra.mrb[0].mxu0 %v142
  %v491 = vpop.f32.mrb[0].mxu0
  %v492 = vadd.f32 0.0, %v491
  %v493 = vpop.f32.mrb[0].mxu0
  %v494 = vadd.f32 0.0, %v493
  %495 = vmatprep.mubr.f32.mxu0 %v146
  %496 = vmatmul.mubr.f32.gmra.mrb[0].mxu0 %v145
  %v497 = vpop.f32.mrb[0].mxu0
  %v498 = vadd.f32 0.0, %v497
  %v499 = vpop.f32.mrb[0].mxu0
  %v500 = vadd.f32 0.0, %v499
  %501 = vmatprep.mubr.f32.mxu0 %v149
  %502 = vmatmul.mubr.f32.gmra.mrb[0].mxu0 %v148
  %v503 = vpop.f32.mrb[0].mxu0
  %v504 = vadd.f32 0.0, %v503
  %v505 = vpop.f32.mrb[0].mxu0
  %v506 = vadd.f32 0.0, %v505
  %507 = vmatprep.mubr.f32.mxu0 %v152
  %508 = vmatmul.mubr.f32.gmra.mrb[0].mxu0 %v151
  %v509 = vpop.f32.mrb[0].mxu0
  %v510 = vadd.f32 0.0, %v509
  %v511 = vpop.f32.mrb[0].mxu0
  %v512 = vadd.f32 0.0, %v511
  %513 = vmatprep.mubr.f32.mxu0 %v155
  %514 = vmatmul.mubr.f32.gmra.mrb[0].mxu0 %v154
  %v515 = vpop.f32.mrb[0].mxu0
  %v516 = vadd.f32 0.0, %v515
  %v517 = vpop.f32.mrb[0].mxu0
  %v518 = vadd.f32 0.0, %v517
  %519 = vmatprep.mubr.f32.mxu0 %v158
  %520 = vmatmul.mubr.f32.gmra.mrb[0].mxu0 %v157
  %v521 = vpop.f32.mrb[0].mxu0
  %v522 = vadd.f32 0.0, %v521
  %v523 = vpop.f32.mrb[0].mxu0
  %v524 = vadd.f32 0.0, %v523
  %525 = vmatprep.mubr.f32.mxu0 %v161
  %526 = vmatmul.mubr.f32.gmra.mrb[0].mxu0 %v160
  %v527 = vpop.f32.mrb[0].mxu0
  %v528 = vadd.f32 0.0, %v527
  %v529 = vpop.f32.mrb[0].mxu0
  %v530 = vadd.f32 0.0, %v529
  %531 = vmatprep.mubr.f32.mxu0 %v164
  %532 = vmatmul.mubr.f32.gmra.mrb[0].mxu0 %v163
  %v533 = vpop.f32.mrb[0].mxu0
  %v534 = vadd.f32 0.0, %v533
  %v535 = vpop.f32.mrb[0].mxu0
  %v536 = vadd.f32 0.0, %v535
  %537 = vmatprep.mubr.f32.mxu0 %v167
  %538 = vmatmul.mubr.f32.gmra.mrb[0].mxu0 %v166
  %v539 = vpop.f32.mrb[0].mxu0
  %v540 = vadd.f32 0.0, %v539
  %v541 = vpop.f32.mrb[0].mxu0
  %v542 = vadd.f32 0.0, %v541
  %543 = vmatprep.mubr.f32.mxu0 %v170
  %544 = vmatmul.mubr.f32.gmra.mrb[0].mxu0 %v169
  %v545 = vpop.f32.mrb[0].mxu0
  %v546 = vadd.f32 0.0, %v545
  %v547 = vpop.f32.mrb[0].mxu0
  %v548 = vadd.f32 0.0, %v547
  %549 = vmatprep.mubr.f32.mxu0 %v173
  %550 = vmatmul.mubr.f32.gmra.mrb[0].mxu0 %v172
  %v551 = vpop.f32.mrb[0].mxu0
  %v552 = vadd.f32 0.0, %v551
  %v553 = vpop.f32.mrb[0].mxu0
  %v554 = vadd.f32 0.0, %v553
  %555 = vmatprep.mubr.f32.mxu0 %v176
  %556 = vmatmul.mubr.f32.gmra.mrb[0].mxu0 %v175
  %v557 = vpop.f32.mrb[0].mxu0
  %v558 = vadd.f32 0.0, %v557
  %v559 = vpop.f32.mrb[0].mxu0
  %v560 = vadd.f32 0.0, %v559
  %561 = vmatprep.mubr.f32.mxu0 %v179
  %562 = vmatmul.mubr.f32.gmra.mrb[0].mxu0 %v178
  %v563 = vpop.f32.mrb[0].mxu0
  %v564 = vadd.f32 0.0, %v563
  %v565 = vpop.f32.mrb[0].mxu0
  %v566 = vadd.f32 0.0, %v565
  %567 = vmatprep.mubr.f32.mxu0 %v182
  %568 = vmatmul.mubr.f32.gmra.mrb[0].mxu0 %v181
  %v569 = vpop.f32.mrb[0].mxu0
  %v570 = vadd.f32 0.0, %v569
  %v571 = vpop.f32.mrb[0].mxu0
  %v572 = vadd.f32 0.0, %v571
  %573 = vmatprep.mubr.f32.mxu0 %v185
  %574 = vmatmul.mubr.f32.gmra.mrb[0].mxu0 %v184
  %v575 = vpop.f32.mrb[0].mxu0
  %v576 = vadd.f32 0.0, %v575
  %v577 = vpop.f32.mrb[0].mxu0
  %v578 = vadd.f32 0.0, %v577
  %579 = vmatprep.mubr.f32.mxu0 %v188
  %580 = vmatmul.mubr.f32.gmra.mrb[0].mxu0 %v187
  %v581 = vpop.f32.mrb[0].mxu0
  %v582 = vadd.f32 0.0, %v581
  %v583 = vpop.f32.mrb[0].mxu0
  %v584 = vadd.f32 0.0, %v583
  %585 = vmatprep.mubr.f32.mxu0 %v191
  %586 = vmatmul.mubr.f32.gmra.mrb[0].mxu0 %v190
  %v587 = vpop.f32.mrb[0].mxu0
  %v588 = vadd.f32 0.0, %v587
  %v589 = vpop.f32.mrb[0].mxu0
  %v590 = vadd.f32 0.0, %v589
  %591 = vmatprep.mubr.f32.mxu0 %v194
  %592 = vmatmul.mubr.f32.gmra.mrb[0].mxu0 %v193
  %v593 = vpop.f32.mrb[0].mxu0
  %v594 = vadd.f32 0.0, %v593
  %v595 = vpop.f32.mrb[0].mxu0
  %v596 = vadd.f32 0.0, %v595
  %597 = vmatprep.mubr.f32.mxu0 %v197
  %598 = vmatmul.mubr.f32.gmra.mrb[0].mxu0 %v196
  %v599 = vpop.f32.mrb[0].mxu0
  %v600 = vadd.f32 0.0, %v599
  %v601 = vpop.f32.mrb[0].mxu0
  %v602 = vadd.f32 0.0, %v601
  %603 = vmatprep.mubr.f32.mxu0 %v200
  %604 = vmatmul.mubr.f32.gmra.mrb[0].mxu0 %v199
  %v605 = vpop.f32.mrb[0].mxu0
  %v606 = vadd.f32 0.0, %v605
  %v607 = vpop.f32.mrb[0].mxu0
  %v608 = vadd.f32 0.0, %v607
  %609 = vmatprep.mubr.f32.mxu0 %v203
  %610 = vmatmul.mubr.f32.gmra.mrb[0].mxu0 %v202
  %v611 = vpop.f32.mrb[0].mxu0
  %v612 = vadd.f32 0.0, %v611
  %v613 = vpop.f32.mrb[0].mxu0
  %v614 = vadd.f32 0.0, %v613
  %615 = vmatprep.mubr.f32.mxu0 %v206
  %616 = vmatmul.mubr.f32.gmra.mrb[0].mxu0 %v205
  %v617 = vpop.f32.mrb[0].mxu0
  %v618 = vadd.f32 0.0, %v617
  %v619 = vpop.f32.mrb[0].mxu0
  %v620 = vadd.f32 0.0, %v619
  %621 = vmatprep.mubr.f32.mxu0 %v209
  %622 = vmatmul.mubr.f32.gmra.mrb[0].mxu0 %v208
  %v623 = vpop.f32.mrb[0].mxu0
  %v624 = vadd.f32 0.0, %v623
  %v625 = vpop.f32.mrb[0].mxu0
  %v626 = vadd.f32 0.0, %v625
  %627 = vmatprep.mubr.f32.mxu0 %v212
  %628 = vmatmul.mubr.f32.gmra.mrb[0].mxu0 %v211
  %v629 = vpop.f32.mrb[0].mxu0
  %v630 = vadd.f32 0.0, %v629
  %v631 = vpop.f32.mrb[0].mxu0
  %v632 = vadd.f32 0.0, %v631
  %633 = vmatprep.mubr.f32.mxu0 %v215
  %634 = vmatmul.mubr.f32.gmra.mrb[0].mxu0 %v214
  %v635 = vpop.f32.mrb[0].mxu0
  %v636 = vadd.f32 0.0, %v635
  %v637 = vpop.f32.mrb[0].mxu0
  %v638 = vadd.f32 0.0, %v637
  %639 = vmatprep.mubr.f32.mxu0 %v218
  %640 = vmatmul.mubr.f32.gmra.mrb[0].mxu0 %v217
  %v641 = vpop.f32.mrb[0].mxu0
  %v642 = vadd.f32 0.0, %v641
  %v643 = vpop.f32.mrb[0].mxu0
  %v644 = vadd.f32 0.0, %v643
  %645 = vdwg.mxu0
  %646 = vmatprep.subr.mxu0 %v85
  %647 = vmatpush1.msra.mxu0 %v84
  %648 = vmatprep.subr.mxu0 %v87
  %649 = vmatpush1.msra.mxu0 %v86
  %650 = vmatprep.subr.mxu0 %v89
  %651 = vmatpush1.msra.mxu0 %v88
  %652 = vmatprep.subr.mxu0 %v91
  %653 = vmatpush1.msra.mxu0 %v90
  %654 = vmatprep.subr.mxu0 %v93
  %655 = vmatpush1.msra.mxu0 %v92
  %656 = vmatprep.subr.mxu0 %v95
  %657 = vmatpush1.msra.mxu0 %v94
  %658 = vmatprep.subr.mxu0 %v97
  %659 = vmatpush1.msra.mxu0 %v96
  %660 = vmatprep.subr.mxu0 %v99
  %661 = vmatpush1.msra.mxu0 %v98
  %662 = vmatprep.subr.mxu0 0.0
  %663 = vmatpush1.msra.mxu0 0.0
  %664 = vmatprep.subr.mxu0 0.0
  %665 = vmatpush1.msra.mxu0 0.0
  %666 = vmatprep.subr.mxu0 0.0
  %667 = vmatpush1.msra.mxu0 0.0
  %668 = vmatprep.subr.mxu0 0.0
  %669 = vmatpush1.msra.mxu0 0.0
  %670 = vmatprep.subr.mxu0 0.0
  %671 = vmatpush1.msra.mxu0 0.0
  %672 = vmatprep.subr.mxu0 0.0
  %673 = vmatpush1.msra.mxu0 0.0
  %674 = vmatprep.subr.mxu0 0.0
  %675 = vmatpush1.msra.mxu0 0.0
  %676 = vmatprep.subr.mxu0 0.0
  %677 = vmatpush1.msra.mxu0 0.0
  %678 = vmatprep.subr.mxu0 0.0
  %679 = vmatpush1.msra.mxu0 0.0
  %680 = vmatprep.subr.mxu0 0.0
  %681 = vmatpush1.msra.mxu0 0.0
  %682 = vmatprep.subr.mxu0 0.0
  %683 = vmatpush1.msra.mxu0 0.0
  %684 = vmatprep.subr.mxu0 0.0
  %685 = vmatpush1.msra.mxu0 0.0
  %686 = vmatprep.subr.mxu0 0.0
  %687 = vmatpush1.msra.mxu0 0.0
  %688 = vmatprep.subr.mxu0 0.0
  %689 = vmatpush1.msra.mxu0 0.0
  %690 = vmatprep.subr.mxu0 0.0
  %691 = vmatpush1.msra.mxu0 0.0
  %692 = vmatprep.subr.mxu0 0.0
  %693 = vmatpush1.msra.mxu0 0.0
  %694 = vmatprep.subr.mxu0 0.0
  %695 = vmatpush1.msra.mxu0 0.0
  %696 = vmatprep.subr.mxu0 0.0
  %697 = vmatpush1.msra.mxu0 0.0
  %698 = vmatprep.subr.mxu0 0.0
  %699 = vmatpush1.msra.mxu0 0.0
  %700 = vmatprep.subr.mxu0 0.0
  %701 = vmatpush1.msra.mxu0 0.0
  %702 = vmatprep.subr.mxu0 0.0
  %703 = vmatpush1.msra.mxu0 0.0
  %704 = vmatprep.subr.mxu0 0.0
  %705 = vmatpush1.msra.mxu0 0.0
  %706 = vmatprep.subr.mxu0 0.0
  %707 = vmatpush1.msra.mxu0 0.0
  %708 = vmatprep.subr.mxu0 0.0
  %709 = vmatpush1.msra.mxu0 0.0
  %710 = vmatprep.mubr.f32.mxu0 0.0
  %711 = vmatmul.mubr.f32.gmra.mrb[0].mxu0 %v222
  %v712 = vpop.f32.mrb[0].mxu0
  %v713 = vadd.f32 %v408, %v712
  %v714 = vpop.f32.mrb[0].mxu0
  %v715 = vadd.f32 %v410, %v714
  %716 = vmatprep.mubr.f32.mxu0 0.0
  %717 = vmatmul.mubr.f32.gmra.mrb[0].mxu0 %v225
  %v718 = vpop.f32.mrb[0].mxu0
  %v719 = vadd.f32 %v414, %v718
  %v720 = vpop.f32.mrb[0].mxu0
  %v721 = vadd.f32 %v416, %v720
  %722 = vmatprep.mubr.f32.mxu0 0.0
  %723 = vmatmul.mubr.f32.gmra.mrb[0].mxu0 %v228
  %v724 = vpop.f32.mrb[0].mxu0
  %v725 = vadd.f32 %v420, %v724
  %v726 = vpop.f32.mrb[0].mxu0
  %v727 = vadd.f32 %v422, %v726
  %728 = vmatprep.mubr.f32.mxu0 0.0
  %729 = vmatmul.mubr.f32.gmra.mrb[0].mxu0 %v231
  %v730 = vpop.f32.mrb[0].mxu0
  %v731 = vadd.f32 %v426, %v730
  %v732 = vpop.f32.mrb[0].mxu0
  %v733 = vadd.f32 %v428, %v732
  %734 = vmatprep.mubr.f32.mxu0 0.0
  %735 = vmatmul.mubr.f32.gmra.mrb[0].mxu0 %v234
  %v736 = vpop.f32.mrb[0].mxu0
  %v737 = vadd.f32 %v432, %v736
  %v738 = vpop.f32.mrb[0].mxu0
  %v739 = vadd.f32 %v434, %v738
  %740 = vmatprep.mubr.f32.mxu0 0.0
  %741 = vmatmul.mubr.f32.gmra.mrb[0].mxu0 %v237
  %v742 = vpop.f32.mrb[0].mxu0
  %v743 = vadd.f32 %v438, %v742
  %v744 = vpop.f32.mrb[0].mxu0
  %v745 = vadd.f32 %v440, %v744
  %746 = vmatprep.mubr.f32.mxu0 0.0
  %747 = vmatmul.mubr.f32.gmra.mrb[0].mxu0 %v240
  %v748 = vpop.f32.mrb[0].mxu0
  %v749 = vadd.f32 %v444, %v748
  %v750 = vpop.f32.mrb[0].mxu0
  %v751 = vadd.f32 %v446, %v750
  %752 = vmatprep.mubr.f32.mxu0 0.0
  %753 = vmatmul.mubr.f32.gmra.mrb[0].mxu0 %v243
  %v754 = vpop.f32.mrb[0].mxu0
  %v755 = vadd.f32 %v450, %v754
  %v756 = vpop.f32.mrb[0].mxu0
  %v757 = vadd.f32 %v452, %v756
  %758 = vmatprep.mubr.f32.mxu0 0.0
  %759 = vmatmul.mubr.f32.gmra.mrb[0].mxu0 %v246
  %v760 = vpop.f32.mrb[0].mxu0
  %v761 = vadd.f32 %v456, %v760
  %v762 = vpop.f32.mrb[0].mxu0
  %v763 = vadd.f32 %v458, %v762
  %764 = vmatprep.mubr.f32.mxu0 0.0
  %765 = vmatmul.mubr.f32.gmra.mrb[0].mxu0 %v249
  %v766 = vpop.f32.mrb[0].mxu0
  %v767 = vadd.f32 %v462, %v766
  %v768 = vpop.f32.mrb[0].mxu0
  %v769 = vadd.f32 %v464, %v768
  %770 = vmatprep.mubr.f32.mxu0 0.0
  %771 = vmatmul.mubr.f32.gmra.mrb[0].mxu0 %v252
  %v772 = vpop.f32.mrb[0].mxu0
  %v773 = vadd.f32 %v468, %v772
  %v774 = vpop.f32.mrb[0].mxu0
  %v775 = vadd.f32 %v470, %v774
  %776 = vmatprep.mubr.f32.mxu0 0.0
  %777 = vmatmul.mubr.f32.gmra.mrb[0].mxu0 %v255
  %v778 = vpop.f32.mrb[0].mxu0
  %v779 = vadd.f32 %v474, %v778
  %v780 = vpop.f32.mrb[0].mxu0
  %v781 = vadd.f32 %v476, %v780
  %782 = vmatprep.mubr.f32.mxu0 0.0
  %783 = vmatmul.mubr.f32.gmra.mrb[0].mxu0 %v258
  %v784 = vpop.f32.mrb[0].mxu0
  %v785 = vadd.f32 %v480, %v784
  %v786 = vpop.f32.mrb[0].mxu0
  %v787 = vadd.f32 %v482, %v786
  %788 = vmatprep.mubr.f32.mxu0 0.0
  %789 = vmatmul.mubr.f32.gmra.mrb[0].mxu0 %v261
  %v790 = vpop.f32.mrb[0].mxu0
  %v791 = vadd.f32 %v486, %v790
  %v792 = vpop.f32.mrb[0].mxu0
  %v793 = vadd.f32 %v488, %v792
  %794 = vmatprep.mubr.f32.mxu0 0.0
  %795 = vmatmul.mubr.f32.gmra.mrb[0].mxu0 %v264
  %v796 = vpop.f32.mrb[0].mxu0
  %v797 = vadd.f32 %v492, %v796
  %v798 = vpop.f32.mrb[0].mxu0
  %v799 = vadd.f32 %v494, %v798
  %800 = vmatprep.mubr.f32.mxu0 0.0
  %801 = vmatmul.mubr.f32.gmra.mrb[0].mxu0 %v267
  %v802 = vpop.f32.mrb[0].mxu0
  %v803 = vadd.f32 %v498, %v802
  %v804 = vpop.f32.mrb[0].mxu0
  %v805 = vadd.f32 %v500, %v804
  %806 = vmatprep.mubr.f32.mxu0 0.0
  %807 = vmatmul.mubr.f32.gmra.mrb[0].mxu0 %v270
  %v808 = vpop.f32.mrb[0].mxu0
  %v809 = vadd.f32 %v504, %v808
  %v810 = vpop.f32.mrb[0].mxu0
  %v811 = vadd.f32 %v506, %v810
  %812 = vmatprep.mubr.f32.mxu0 0.0
  %813 = vmatmul.mubr.f32.gmra.mrb[0].mxu0 %v273
  %v814 = vpop.f32.mrb[0].mxu0
  %v815 = vadd.f32 %v510, %v814
  %v816 = vpop.f32.mrb[0].mxu0
  %v817 = vadd.f32 %v512, %v816
  %818 = vmatprep.mubr.f32.mxu0 0.0
  %819 = vmatmul.mubr.f32.gmra.mrb[0].mxu0 %v276
  %v820 = vpop.f32.mrb[0].mxu0
  %v821 = vadd.f32 %v516, %v820
  %v822 = vpop.f32.mrb[0].mxu0
  %v823 = vadd.f32 %v518, %v822
  %824 = vmatprep.mubr.f32.mxu0 0.0
  %825 = vmatmul.mubr.f32.gmra.mrb[0].mxu0 %v279
  %v826 = vpop.f32.mrb[0].mxu0
  %v827 = vadd.f32 %v522, %v826
  %v828 = vpop.f32.mrb[0].mxu0
  %v829 = vadd.f32 %v524, %v828
  %830 = vmatprep.mubr.f32.mxu0 0.0
  %831 = vmatmul.mubr.f32.gmra.mrb[0].mxu0 %v282
  %v832 = vpop.f32.mrb[0].mxu0
  %v833 = vadd.f32 %v528, %v832
  %v834 = vpop.f32.mrb[0].mxu0
  %v835 = vadd.f32 %v530, %v834
  %836 = vmatprep.mubr.f32.mxu0 0.0
  %837 = vmatmul.mubr.f32.gmra.mrb[0].mxu0 %v285
  %v838 = vpop.f32.mrb[0].mxu0
  %v839 = vadd.f32 %v534, %v838
  %v840 = vpop.f32.mrb[0].mxu0
  %v841 = vadd.f32 %v536, %v840
  %842 = vmatprep.mubr.f32.mxu0 0.0
  %843 = vmatmul.mubr.f32.gmra.mrb[0].mxu0 %v288
  %v844 = vpop.f32.mrb[0].mxu0
  %v845 = vadd.f32 %v540, %v844
  %v846 = vpop.f32.mrb[0].mxu0
  %v847 = vadd.f32 %v542, %v846
  %848 = vmatprep.mubr.f32.mxu0 0.0
  %849 = vmatmul.mubr.f32.gmra.mrb[0].mxu0 %v291
  %v850 = vpop.f32.mrb[0].mxu0
  %v851 = vadd.f32 %v546, %v850
  %v852 = vpop.f32.mrb[0].mxu0
  %v853 = vadd.f32 %v548, %v852
  %854 = vmatprep.mubr.f32.mxu0 0.0
  %855 = vmatmul.mubr.f32.gmra.mrb[0].mxu0 %v294
  %v856 = vpop.f32.mrb[0].mxu0
  %v857 = vadd.f32 %v552, %v856
  %v858 = vpop.f32.mrb[0].mxu0
  %v859 = vadd.f32 %v554, %v858
  %860 = vmatprep.mubr.f32.mxu0 0.0
  %861 = vmatmul.mubr.f32.gmra.mrb[0].mxu0 %v297
  %v862 = vpop.f32.mrb[0].mxu0
  %v863 = vadd.f32 %v558, %v862
  %v864 = vpop.f32.mrb[0].mxu0
  %v865 = vadd.f32 %v560, %v864
  %866 = vmatprep.mubr.f32.mxu0 0.0
  %867 = vmatmul.mubr.f32.gmra.mrb[0].mxu0 %v300
  %v868 = vpop.f32.mrb[0].mxu0
  %v869 = vadd.f32 %v564, %v868
  %v870 = vpop.f32.mrb[0].mxu0
  %v871 = vadd.f32 %v566, %v870
  %872 = vmatprep.mubr.f32.mxu0 0.0
  %873 = vmatmul.mubr.f32.gmra.mrb[0].mxu0 %v303
  %v874 = vpop.f32.mrb[0].mxu0
  %v875 = vadd.f32 %v570, %v874
  %v876 = vpop.f32.mrb[0].mxu0
  %v877 = vadd.f32 %v572, %v876
  %878 = vmatprep.mubr.f32.mxu0 0.0
  %879 = vmatmul.mubr.f32.gmra.mrb[0].mxu0 %v306
  %v880 = vpop.f32.mrb[0].mxu0
  %v881 = vadd.f32 %v576, %v880
  %v882 = vpop.f32.mrb[0].mxu0
  %v883 = vadd.f32 %v578, %v882
  %884 = vmatprep.mubr.f32.mxu0 0.0
  %885 = vmatmul.mubr.f32.gmra.mrb[0].mxu0 %v309
  %v886 = vpop.f32.mrb[0].mxu0
  %v887 = vadd.f32 %v582, %v886
  %v888 = vpop.f32.mrb[0].mxu0
  %v889 = vadd.f32 %v584, %v888
  %890 = vmatprep.mubr.f32.mxu0 0.0
  %891 = vmatmul.mubr.f32.gmra.mrb[0].mxu0 %v312
  %v892 = vpop.f32.mrb[0].mxu0
  %v893 = vadd.f32 %v588, %v892
  %v894 = vpop.f32.mrb[0].mxu0
  %v895 = vadd.f32 %v590, %v894
  %896 = vmatprep.mubr.f32.mxu0 0.0
  %897 = vmatmul.mubr.f32.gmra.mrb[0].mxu0 %v315
  %v898 = vpop.f32.mrb[0].mxu0
  %v899 = vadd.f32 %v594, %v898
  %v900 = vpop.f32.mrb[0].mxu0
  %v901 = vadd.f32 %v596, %v900
  %902 = vmatprep.mubr.f32.mxu0 0.0
  %903 = vmatmul.mubr.f32.gmra.mrb[0].mxu0 %v318
  %v904 = vpop.f32.mrb[0].mxu0
  %v905 = vadd.f32 %v600, %v904
  %v906 = vpop.f32.mrb[0].mxu0
  %v907 = vadd.f32 %v602, %v906
  %908 = vmatprep.mubr.f32.mxu0 0.0
  %909 = vmatmul.mubr.f32.gmra.mrb[0].mxu0 %v321
  %v910 = vpop.f32.mrb[0].mxu0
  %v911 = vadd.f32 %v606, %v910
  %v912 = vpop.f32.mrb[0].mxu0
  %v913 = vadd.f32 %v608, %v912
  %914 = vmatprep.mubr.f32.mxu0 0.0
  %915 = vmatmul.mubr.f32.gmra.mrb[0].mxu0 %v324
  %v916 = vpop.f32.mrb[0].mxu0
  %v917 = vadd.f32 %v612, %v916
  %v918 = vpop.f32.mrb[0].mxu0
  %v919 = vadd.f32 %v614, %v918
  %920 = vmatprep.mubr.f32.mxu0 0.0
  %921 = vmatmul.mubr.f32.gmra.mrb[0].mxu0 %v327
  %v922 = vpop.f32.mrb[0].mxu0
  %v923 = vadd.f32 %v618, %v922
  %v924 = vpop.f32.mrb[0].mxu0
  %v925 = vadd.f32 %v620, %v924
  %926 = vmatprep.mubr.f32.mxu0 0.0
  %927 = vmatmul.mubr.f32.gmra.mrb[0].mxu0 %v330
  %v928 = vpop.f32.mrb[0].mxu0
  %v929 = vadd.f32 %v624, %v928
  %v930 = vpop.f32.mrb[0].mxu0
  %v931 = vadd.f32 %v626, %v930
  %932 = vmatprep.mubr.f32.mxu0 0.0
  %933 = vmatmul.mubr.f32.gmra.mrb[0].mxu0 %v333
  %v934 = vpop.f32.mrb[0].mxu0
  %v935 = vadd.f32 %v630, %v934
  %v936 = vpop.f32.mrb[0].mxu0
  %v937 = vadd.f32 %v632, %v936
  %938 = vmatprep.mubr.f32.mxu0 0.0
  %939 = vmatmul.mubr.f32.gmra.mrb[0].mxu0 %v336
  %v940 = vpop.f32.mrb[0].mxu0
  %v941 = vadd.f32 %v636, %v940
  %v942 = vpop.f32.mrb[0].mxu0
  %v943 = vadd.f32 %v638, %v942
  %944 = vmatprep.mubr.f32.mxu0 0.0
  %945 = vmatmul.mubr.f32.gmra.mrb[0].mxu0 %v339
  %v946 = vpop.f32.mrb[0].mxu0
  %v947 = vadd.f32 %v642, %v946
  %v948 = vpop.f32.mrb[0].mxu0
  %v949 = vadd.f32 %v644, %v948
  %950 = vdwg.mxu0
  %vm951 = vcmask 556032
  %v952 = vsel %vm951, %v715, 0.0
  %v953 = vadd.f32 %v713, %v952
  %954 = vadd.xlane.f32.xlu0 %v953
  %v955 = vpop.xlane.xlu0 %954
  %v956 = vsel %vm951, %v721, 0.0
  %v957 = vadd.f32 %v719, %v956
  %958 = vadd.xlane.f32.xlu0 %v957
  %v959 = vpop.xlane.xlu0 %958
  %v960 = vsel %vm951, %v727, 0.0
  %v961 = vadd.f32 %v725, %v960
  %962 = vadd.xlane.f32.xlu0 %v961
  %v963 = vpop.xlane.xlu0 %962
  %v964 = vsel %vm951, %v733, 0.0
  %v965 = vadd.f32 %v731, %v964
  %966 = vadd.xlane.f32.xlu0 %v965
  %v967 = vpop.xlane.xlu0 %966
  %v968 = vsel %vm951, %v739, 0.0
  %v969 = vadd.f32 %v737, %v968
  %970 = vadd.xlane.f32.xlu0 %v969
  %v971 = vpop.xlane.xlu0 %970
  %v972 = vsel %vm951, %v745, 0.0
  %v973 = vadd.f32 %v743, %v972
  %974 = vadd.xlane.f32.xlu0 %v973
  %v975 = vpop.xlane.xlu0 %974
  %v976 = vsel %vm951, %v751, 0.0
  %v977 = vadd.f32 %v749, %v976
  %978 = vadd.xlane.f32.xlu0 %v977
  %v979 = vpop.xlane.xlu0 %978
  %v980 = vsel %vm951, %v757, 0.0
  %v981 = vadd.f32 %v755, %v980
  %982 = vadd.xlane.f32.xlu0 %v981
  %v983 = vpop.xlane.xlu0 %982
  %v984 = vsel %vm951, %v763, 0.0
  %v985 = vadd.f32 %v761, %v984
  %986 = vadd.xlane.f32.xlu0 %v985
  %v987 = vpop.xlane.xlu0 %986
  %v988 = vsel %vm951, %v769, 0.0
  %v989 = vadd.f32 %v767, %v988
  %990 = vadd.xlane.f32.xlu0 %v989
  %v991 = vpop.xlane.xlu0 %990
  %v992 = vsel %vm951, %v775, 0.0
  %v993 = vadd.f32 %v773, %v992
  %994 = vadd.xlane.f32.xlu0 %v993
  %v995 = vpop.xlane.xlu0 %994
  %v996 = vsel %vm951, %v781, 0.0
  %v997 = vadd.f32 %v779, %v996
  %998 = vadd.xlane.f32.xlu0 %v997
  %v999 = vpop.xlane.xlu0 %998
  %v1000 = vsel %vm951, %v787, 0.0
  %v1001 = vadd.f32 %v785, %v1000
  %1002 = vadd.xlane.f32.xlu0 %v1001
  %v1003 = vpop.xlane.xlu0 %1002
  %v1004 = vsel %vm951, %v793, 0.0
  %v1005 = vadd.f32 %v791, %v1004
  %1006 = vadd.xlane.f32.xlu0 %v1005
  %v1007 = vpop.xlane.xlu0 %1006
  %v1008 = vsel %vm951, %v799, 0.0
  %v1009 = vadd.f32 %v797, %v1008
  %1010 = vadd.xlane.f32.xlu0 %v1009
  %v1011 = vpop.xlane.xlu0 %1010
  %v1012 = vsel %vm951, %v805, 0.0
  %v1013 = vadd.f32 %v803, %v1012
  %1014 = vadd.xlane.f32.xlu0 %v1013
  %v1015 = vpop.xlane.xlu0 %1014
  %v1016 = vsel %vm951, %v811, 0.0
  %v1017 = vadd.f32 %v809, %v1016
  %1018 = vadd.xlane.f32.xlu0 %v1017
  %v1019 = vpop.xlane.xlu0 %1018
  %v1020 = vsel %vm951, %v817, 0.0
  %v1021 = vadd.f32 %v815, %v1020
  %1022 = vadd.xlane.f32.xlu0 %v1021
  %v1023 = vpop.xlane.xlu0 %1022
  %v1024 = vsel %vm951, %v823, 0.0
  %v1025 = vadd.f32 %v821, %v1024
  %1026 = vadd.xlane.f32.xlu0 %v1025
  %v1027 = vpop.xlane.xlu0 %1026
  %v1028 = vsel %vm951, %v829, 0.0
  %v1029 = vadd.f32 %v827, %v1028
  %1030 = vadd.xlane.f32.xlu0 %v1029
  %v1031 = vpop.xlane.xlu0 %1030
  %v1032 = vsel %vm951, %v835, 0.0
  %v1033 = vadd.f32 %v833, %v1032
  %1034 = vadd.xlane.f32.xlu0 %v1033
  %v1035 = vpop.xlane.xlu0 %1034
  %v1036 = vsel %vm951, %v841, 0.0
  %v1037 = vadd.f32 %v839, %v1036
  %1038 = vadd.xlane.f32.xlu0 %v1037
  %v1039 = vpop.xlane.xlu0 %1038
  %v1040 = vsel %vm951, %v847, 0.0
  %v1041 = vadd.f32 %v845, %v1040
  %1042 = vadd.xlane.f32.xlu0 %v1041
  %v1043 = vpop.xlane.xlu0 %1042
  %v1044 = vsel %vm951, %v853, 0.0
  %v1045 = vadd.f32 %v851, %v1044
  %1046 = vadd.xlane.f32.xlu0 %v1045
  %v1047 = vpop.xlane.xlu0 %1046
  %v1048 = vsel %vm951, %v859, 0.0
  %v1049 = vadd.f32 %v857, %v1048
  %1050 = vadd.xlane.f32.xlu0 %v1049
  %v1051 = vpop.xlane.xlu0 %1050
  %v1052 = vsel %vm951, %v865, 0.0
  %v1053 = vadd.f32 %v863, %v1052
  %1054 = vadd.xlane.f32.xlu0 %v1053
  %v1055 = vpop.xlane.xlu0 %1054
  %v1056 = vsel %vm951, %v871, 0.0
  %v1057 = vadd.f32 %v869, %v1056
  %1058 = vadd.xlane.f32.xlu0 %v1057
  %v1059 = vpop.xlane.xlu0 %1058
  %v1060 = vsel %vm951, %v877, 0.0
  %v1061 = vadd.f32 %v875, %v1060
  %1062 = vadd.xlane.f32.xlu0 %v1061
  %v1063 = vpop.xlane.xlu0 %1062
  %v1064 = vsel %vm951, %v883, 0.0
  %v1065 = vadd.f32 %v881, %v1064
  %1066 = vadd.xlane.f32.xlu0 %v1065
  %v1067 = vpop.xlane.xlu0 %1066
  %v1068 = vsel %vm951, %v889, 0.0
  %v1069 = vadd.f32 %v887, %v1068
  %1070 = vadd.xlane.f32.xlu0 %v1069
  %v1071 = vpop.xlane.xlu0 %1070
  %v1072 = vsel %vm951, %v895, 0.0
  %v1073 = vadd.f32 %v893, %v1072
  %1074 = vadd.xlane.f32.xlu0 %v1073
  %v1075 = vpop.xlane.xlu0 %1074
  %v1076 = vsel %vm951, %v901, 0.0
  %v1077 = vadd.f32 %v899, %v1076
  %1078 = vadd.xlane.f32.xlu0 %v1077
  %v1079 = vpop.xlane.xlu0 %1078
  %v1080 = vsel %vm951, %v907, 0.0
  %v1081 = vadd.f32 %v905, %v1080
  %1082 = vadd.xlane.f32.xlu0 %v1081
  %v1083 = vpop.xlane.xlu0 %1082
  %v1084 = vsel %vm951, %v913, 0.0
  %v1085 = vadd.f32 %v911, %v1084
  %1086 = vadd.xlane.f32.xlu0 %v1085
  %v1087 = vpop.xlane.xlu0 %1086
  %v1088 = vsel %vm951, %v919, 0.0
  %v1089 = vadd.f32 %v917, %v1088
  %1090 = vadd.xlane.f32.xlu0 %v1089
  %v1091 = vpop.xlane.xlu0 %1090
  %v1092 = vsel %vm951, %v925, 0.0
  %v1093 = vadd.f32 %v923, %v1092
  %1094 = vadd.xlane.f32.xlu0 %v1093
  %v1095 = vpop.xlane.xlu0 %1094
  %v1096 = vsel %vm951, %v931, 0.0
  %v1097 = vadd.f32 %v929, %v1096
  %1098 = vadd.xlane.f32.xlu0 %v1097
  %v1099 = vpop.xlane.xlu0 %1098
  %v1100 = vsel %vm951, %v937, 0.0
  %v1101 = vadd.f32 %v935, %v1100
  %1102 = vadd.xlane.f32.xlu0 %v1101
  %v1103 = vpop.xlane.xlu0 %1102
  %v1104 = vsel %vm951, %v943, 0.0
  %v1105 = vadd.f32 %v941, %v1104
  %1106 = vadd.xlane.f32.xlu0 %v1105
  %v1107 = vpop.xlane.xlu0 %1106
  %v1108 = vsel %vm951, %v949, 0.0
  %v1109 = vadd.f32 %v947, %v1108
  %1110 = vadd.xlane.f32.xlu0 %v1109
  %v1111 = vpop.xlane.xlu0 %1110
  %v1112 = vmul.f32 %v955, 0.0051020407
  %v1113 = vmul.f32 %v959, 0.0051020407
  %v1114 = vmul.f32 %v963, 0.0051020407
  %v1115 = vmul.f32 %v967, 0.0051020407
  %v1116 = vmul.f32 %v971, 0.0051020407
  %v1117 = vmul.f32 %v975, 0.0051020407
  %v1118 = vmul.f32 %v979, 0.0051020407
  %v1119 = vmul.f32 %v983, 0.0051020407
  %v1120 = vmul.f32 %v987, 0.0051020407
  %v1121 = vmul.f32 %v991, 0.0051020407
  %v1122 = vmul.f32 %v995, 0.0051020407
  %v1123 = vmul.f32 %v999, 0.0051020407
  %v1124 = vmul.f32 %v1003, 0.0051020407
  %v1125 = vmul.f32 %v1007, 0.0051020407
  %v1126 = vmul.f32 %v1011, 0.0051020407
  %v1127 = vmul.f32 %v1015, 0.0051020407
  %v1128 = vmul.f32 %v1019, 0.0051020407
  %v1129 = vmul.f32 %v1023, 0.0051020407
  %v1130 = vmul.f32 %v1027, 0.0051020407
  %v1131 = vmul.f32 %v1031, 0.0051020407
  %v1132 = vmul.f32 %v1035, 0.0051020407
  %v1133 = vmul.f32 %v1039, 0.0051020407
  %v1134 = vmul.f32 %v1043, 0.0051020407
  %v1135 = vmul.f32 %v1047, 0.0051020407
  %v1136 = vmul.f32 %v1051, 0.0051020407
  %v1137 = vmul.f32 %v1055, 0.0051020407
  %v1138 = vmul.f32 %v1059, 0.0051020407
  %v1139 = vmul.f32 %v1063, 0.0051020407
  %v1140 = vmul.f32 %v1067, 0.0051020407
  %v1141 = vmul.f32 %v1071, 0.0051020407
  %v1142 = vmul.f32 %v1075, 0.0051020407
  %v1143 = vmul.f32 %v1079, 0.0051020407
  %v1144 = vmul.f32 %v1083, 0.0051020407
  %v1145 = vmul.f32 %v1087, 0.0051020407
  %v1146 = vmul.f32 %v1091, 0.0051020407
  %v1147 = vmul.f32 %v1095, 0.0051020407
  %v1148 = vmul.f32 %v1099, 0.0051020407
  %v1149 = vmul.f32 %v1103, 0.0051020407
  %v1150 = vmul.f32 %v1107, 0.0051020407
  %v1151 = vmul.f32 %v1111, 0.0051020407
  %v1152 = vsub.f32 %v713, %v1112
  %v1153 = vsub.f32 %v715, %v1112
  %v1154 = vsub.f32 %v719, %v1113
  %v1155 = vsub.f32 %v721, %v1113
  %v1156 = vsub.f32 %v725, %v1114
  %v1157 = vsub.f32 %v727, %v1114
  %v1158 = vsub.f32 %v731, %v1115
  %v1159 = vsub.f32 %v733, %v1115
  %v1160 = vsub.f32 %v737, %v1116
  %v1161 = vsub.f32 %v739, %v1116
  %v1162 = vsub.f32 %v743, %v1117
  %v1163 = vsub.f32 %v745, %v1117
  %v1164 = vsub.f32 %v749, %v1118
  %v1165 = vsub.f32 %v751, %v1118
  %v1166 = vsub.f32 %v755, %v1119
  %v1167 = vsub.f32 %v757, %v1119
  %v1168 = vsub.f32 %v761, %v1120
  %v1169 = vsub.f32 %v763, %v1120
  %v1170 = vsub.f32 %v767, %v1121
  %v1171 = vsub.f32 %v769, %v1121
  %v1172 = vsub.f32 %v773, %v1122
  %v1173 = vsub.f32 %v775, %v1122
  %v1174 = vsub.f32 %v779, %v1123
  %v1175 = vsub.f32 %v781, %v1123
  %v1176 = vsub.f32 %v785, %v1124
  %v1177 = vsub.f32 %v787, %v1124
  %v1178 = vsub.f32 %v791, %v1125
  %v1179 = vsub.f32 %v793, %v1125
  %v1180 = vsub.f32 %v797, %v1126
  %v1181 = vsub.f32 %v799, %v1126
  %v1182 = vsub.f32 %v803, %v1127
  %v1183 = vsub.f32 %v805, %v1127
  %v1184 = vsub.f32 %v809, %v1128
  %v1185 = vsub.f32 %v811, %v1128
  %v1186 = vsub.f32 %v815, %v1129
  %v1187 = vsub.f32 %v817, %v1129
  %v1188 = vsub.f32 %v821, %v1130
  %v1189 = vsub.f32 %v823, %v1130
  %v1190 = vsub.f32 %v827, %v1131
  %v1191 = vsub.f32 %v829, %v1131
  %v1192 = vsub.f32 %v833, %v1132
  %v1193 = vsub.f32 %v835, %v1132
  %v1194 = vsub.f32 %v839, %v1133
  %v1195 = vsub.f32 %v841, %v1133
  %v1196 = vsub.f32 %v845, %v1134
  %v1197 = vsub.f32 %v847, %v1134
  %v1198 = vsub.f32 %v851, %v1135
  %v1199 = vsub.f32 %v853, %v1135
  %v1200 = vsub.f32 %v857, %v1136
  %v1201 = vsub.f32 %v859, %v1136
  %v1202 = vsub.f32 %v863, %v1137
  %v1203 = vsub.f32 %v865, %v1137
  %v1204 = vsub.f32 %v869, %v1138
  %v1205 = vsub.f32 %v871, %v1138
  %v1206 = vsub.f32 %v875, %v1139
  %v1207 = vsub.f32 %v877, %v1139
  %v1208 = vsub.f32 %v881, %v1140
  %v1209 = vsub.f32 %v883, %v1140
  %v1210 = vsub.f32 %v887, %v1141
  %v1211 = vsub.f32 %v889, %v1141
  %v1212 = vsub.f32 %v893, %v1142
  %v1213 = vsub.f32 %v895, %v1142
  %v1214 = vsub.f32 %v899, %v1143
  %v1215 = vsub.f32 %v901, %v1143
  %v1216 = vsub.f32 %v905, %v1144
  %v1217 = vsub.f32 %v907, %v1144
  %v1218 = vsub.f32 %v911, %v1145
  %v1219 = vsub.f32 %v913, %v1145
  %v1220 = vsub.f32 %v917, %v1146
  %v1221 = vsub.f32 %v919, %v1146
  %v1222 = vsub.f32 %v923, %v1147
  %v1223 = vsub.f32 %v925, %v1147
  %v1224 = vsub.f32 %v929, %v1148
  %v1225 = vsub.f32 %v931, %v1148
  %v1226 = vsub.f32 %v935, %v1149
  %v1227 = vsub.f32 %v937, %v1149
  %v1228 = vsub.f32 %v941, %v1150
  %v1229 = vsub.f32 %v943, %v1150
  %v1230 = vsub.f32 %v947, %v1151
  %v1231 = vsub.f32 %v949, %v1151
  %v1232 = vmul.f32 %v1152, %v1152
  %v1233 = vmul.f32 %v1153, %v1153
  %v1234 = vmul.f32 %v1154, %v1154
  %v1235 = vmul.f32 %v1155, %v1155
  %v1236 = vmul.f32 %v1156, %v1156
  %v1237 = vmul.f32 %v1157, %v1157
  %v1238 = vmul.f32 %v1158, %v1158
  %v1239 = vmul.f32 %v1159, %v1159
  %v1240 = vmul.f32 %v1160, %v1160
  %v1241 = vmul.f32 %v1161, %v1161
  %v1242 = vmul.f32 %v1162, %v1162
  %v1243 = vmul.f32 %v1163, %v1163
  %v1244 = vmul.f32 %v1164, %v1164
  %v1245 = vmul.f32 %v1165, %v1165
  %v1246 = vmul.f32 %v1166, %v1166
  %v1247 = vmul.f32 %v1167, %v1167
  %v1248 = vmul.f32 %v1168, %v1168
  %v1249 = vmul.f32 %v1169, %v1169
  %v1250 = vmul.f32 %v1170, %v1170
  %v1251 = vmul.f32 %v1171, %v1171
  %v1252 = vmul.f32 %v1172, %v1172
  %v1253 = vmul.f32 %v1173, %v1173
  %v1254 = vmul.f32 %v1174, %v1174
  %v1255 = vmul.f32 %v1175, %v1175
  %v1256 = vmul.f32 %v1176, %v1176
  %v1257 = vmul.f32 %v1177, %v1177
  %v1258 = vmul.f32 %v1178, %v1178
  %v1259 = vmul.f32 %v1179, %v1179
  %v1260 = vmul.f32 %v1180, %v1180
  %v1261 = vmul.f32 %v1181, %v1181
  %v1262 = vmul.f32 %v1182, %v1182
  %v1263 = vmul.f32 %v1183, %v1183
  %v1264 = vmul.f32 %v1184, %v1184
  %v1265 = vmul.f32 %v1185, %v1185
  %v1266 = vmul.f32 %v1186, %v1186
  %v1267 = vmul.f32 %v1187, %v1187
  %v1268 = vmul.f32 %v1188, %v1188
  %v1269 = vmul.f32 %v1189, %v1189
  %v1270 = vmul.f32 %v1190, %v1190
  %v1271 = vmul.f32 %v1191, %v1191
  %v1272 = vmul.f32 %v1192, %v1192
  %v1273 = vmul.f32 %v1193, %v1193
  %v1274 = vmul.f32 %v1194, %v1194
  %v1275 = vmul.f32 %v1195, %v1195
  %v1276 = vmul.f32 %v1196, %v1196
  %v1277 = vmul.f32 %v1197, %v1197
  %v1278 = vmul.f32 %v1198, %v1198
  %v1279 = vmul.f32 %v1199, %v1199
  %v1280 = vmul.f32 %v1200, %v1200
  %v1281 = vmul.f32 %v1201, %v1201
  %v1282 = vmul.f32 %v1202, %v1202
  %v1283 = vmul.f32 %v1203, %v1203
  %v1284 = vmul.f32 %v1204, %v1204
  %v1285 = vmul.f32 %v1205, %v1205
  %v1286 = vmul.f32 %v1206, %v1206
  %v1287 = vmul.f32 %v1207, %v1207
  %v1288 = vmul.f32 %v1208, %v1208
  %v1289 = vmul.f32 %v1209, %v1209
  %v1290 = vmul.f32 %v1210, %v1210
  %v1291 = vmul.f32 %v1211, %v1211
  %v1292 = vmul.f32 %v1212, %v1212
  %v1293 = vmul.f32 %v1213, %v1213
  %v1294 = vmul.f32 %v1214, %v1214
  %v1295 = vmul.f32 %v1215, %v1215
  %v1296 = vmul.f32 %v1216, %v1216
  %v1297 = vmul.f32 %v1217, %v1217
  %v1298 = vmul.f32 %v1218, %v1218
  %v1299 = vmul.f32 %v1219, %v1219
  %v1300 = vmul.f32 %v1220, %v1220
  %v1301 = vmul.f32 %v1221, %v1221
  %v1302 = vmul.f32 %v1222, %v1222
  %v1303 = vmul.f32 %v1223, %v1223
  %v1304 = vmul.f32 %v1224, %v1224
  %v1305 = vmul.f32 %v1225, %v1225
  %v1306 = vmul.f32 %v1226, %v1226
  %v1307 = vmul.f32 %v1227, %v1227
  %v1308 = vmul.f32 %v1228, %v1228
  %v1309 = vmul.f32 %v1229, %v1229
  %v1310 = vmul.f32 %v1230, %v1230
  %v1311 = vmul.f32 %v1231, %v1231
  %v1312 = vsel %vm951, %v1233, 0.0
  %v1313 = vadd.f32 %v1232, %v1312
  %1314 = vadd.xlane.f32.xlu0 %v1313
  %v1315 = vpop.xlane.xlu0 %1314
  %v1316 = vsel %vm951, %v1235, 0.0
  %v1317 = vadd.f32 %v1234, %v1316
  %1318 = vadd.xlane.f32.xlu0 %v1317
  %v1319 = vpop.xlane.xlu0 %1318
  %v1320 = vsel %vm951, %v1237, 0.0
  %v1321 = vadd.f32 %v1236, %v1320
  %1322 = vadd.xlane.f32.xlu0 %v1321
  %v1323 = vpop.xlane.xlu0 %1322
  %v1324 = vsel %vm951, %v1239, 0.0
  %v1325 = vadd.f32 %v1238, %v1324
  %1326 = vadd.xlane.f32.xlu0 %v1325
  %v1327 = vpop.xlane.xlu0 %1326
  %v1328 = vsel %vm951, %v1241, 0.0
  %v1329 = vadd.f32 %v1240, %v1328
  %1330 = vadd.xlane.f32.xlu0 %v1329
  %v1331 = vpop.xlane.xlu0 %1330
  %v1332 = vsel %vm951, %v1243, 0.0
  %v1333 = vadd.f32 %v1242, %v1332
  %1334 = vadd.xlane.f32.xlu0 %v1333
  %v1335 = vpop.xlane.xlu0 %1334
  %v1336 = vsel %vm951, %v1245, 0.0
  %v1337 = vadd.f32 %v1244, %v1336
  %1338 = vadd.xlane.f32.xlu0 %v1337
  %v1339 = vpop.xlane.xlu0 %1338
  %v1340 = vsel %vm951, %v1247, 0.0
  %v1341 = vadd.f32 %v1246, %v1340
  %1342 = vadd.xlane.f32.xlu0 %v1341
  %v1343 = vpop.xlane.xlu0 %1342
  %v1344 = vsel %vm951, %v1249, 0.0
  %v1345 = vadd.f32 %v1248, %v1344
  %1346 = vadd.xlane.f32.xlu0 %v1345
  %v1347 = vpop.xlane.xlu0 %1346
  %v1348 = vsel %vm951, %v1251, 0.0
  %v1349 = vadd.f32 %v1250, %v1348
  %1350 = vadd.xlane.f32.xlu0 %v1349
  %v1351 = vpop.xlane.xlu0 %1350
  %v1352 = vsel %vm951, %v1253, 0.0
  %v1353 = vadd.f32 %v1252, %v1352
  %1354 = vadd.xlane.f32.xlu0 %v1353
  %v1355 = vpop.xlane.xlu0 %1354
  %v1356 = vsel %vm951, %v1255, 0.0
  %v1357 = vadd.f32 %v1254, %v1356
  %1358 = vadd.xlane.f32.xlu0 %v1357
  %v1359 = vpop.xlane.xlu0 %1358
  %v1360 = vsel %vm951, %v1257, 0.0
  %v1361 = vadd.f32 %v1256, %v1360
  %1362 = vadd.xlane.f32.xlu0 %v1361
  %v1363 = vpop.xlane.xlu0 %1362
  %v1364 = vsel %vm951, %v1259, 0.0
  %v1365 = vadd.f32 %v1258, %v1364
  %1366 = vadd.xlane.f32.xlu0 %v1365
  %v1367 = vpop.xlane.xlu0 %1366
  %v1368 = vsel %vm951, %v1261, 0.0
  %v1369 = vadd.f32 %v1260, %v1368
  %1370 = vadd.xlane.f32.xlu0 %v1369
  %v1371 = vpop.xlane.xlu0 %1370
  %v1372 = vsel %vm951, %v1263, 0.0
  %v1373 = vadd.f32 %v1262, %v1372
  %1374 = vadd.xlane.f32.xlu0 %v1373
  %v1375 = vpop.xlane.xlu0 %1374
  %v1376 = vsel %vm951, %v1265, 0.0
  %v1377 = vadd.f32 %v1264, %v1376
  %1378 = vadd.xlane.f32.xlu0 %v1377
  %v1379 = vpop.xlane.xlu0 %1378
  %v1380 = vsel %vm951, %v1267, 0.0
  %v1381 = vadd.f32 %v1266, %v1380
  %1382 = vadd.xlane.f32.xlu0 %v1381
  %v1383 = vpop.xlane.xlu0 %1382
  %v1384 = vsel %vm951, %v1269, 0.0
  %v1385 = vadd.f32 %v1268, %v1384
  %1386 = vadd.xlane.f32.xlu0 %v1385
  %v1387 = vpop.xlane.xlu0 %1386
  %v1388 = vsel %vm951, %v1271, 0.0
  %v1389 = vadd.f32 %v1270, %v1388
  %1390 = vadd.xlane.f32.xlu0 %v1389
  %v1391 = vpop.xlane.xlu0 %1390
  %v1392 = vsel %vm951, %v1273, 0.0
  %v1393 = vadd.f32 %v1272, %v1392
  %1394 = vadd.xlane.f32.xlu0 %v1393
  %v1395 = vpop.xlane.xlu0 %1394
  %v1396 = vsel %vm951, %v1275, 0.0
  %v1397 = vadd.f32 %v1274, %v1396
  %1398 = vadd.xlane.f32.xlu0 %v1397
  %v1399 = vpop.xlane.xlu0 %1398
  %v1400 = vsel %vm951, %v1277, 0.0
  %v1401 = vadd.f32 %v1276, %v1400
  %1402 = vadd.xlane.f32.xlu0 %v1401
  %v1403 = vpop.xlane.xlu0 %1402
  %v1404 = vsel %vm951, %v1279, 0.0
  %v1405 = vadd.f32 %v1278, %v1404
  %1406 = vadd.xlane.f32.xlu0 %v1405
  %v1407 = vpop.xlane.xlu0 %1406
  %v1408 = vsel %vm951, %v1281, 0.0
  %v1409 = vadd.f32 %v1280, %v1408
  %1410 = vadd.xlane.f32.xlu0 %v1409
  %v1411 = vpop.xlane.xlu0 %1410
  %v1412 = vsel %vm951, %v1283, 0.0
  %v1413 = vadd.f32 %v1282, %v1412
  %1414 = vadd.xlane.f32.xlu0 %v1413
  %v1415 = vpop.xlane.xlu0 %1414
  %v1416 = vsel %vm951, %v1285, 0.0
  %v1417 = vadd.f32 %v1284, %v1416
  %1418 = vadd.xlane.f32.xlu0 %v1417
  %v1419 = vpop.xlane.xlu0 %1418
  %v1420 = vsel %vm951, %v1287, 0.0
  %v1421 = vadd.f32 %v1286, %v1420
  %1422 = vadd.xlane.f32.xlu0 %v1421
  %v1423 = vpop.xlane.xlu0 %1422
  %v1424 = vsel %vm951, %v1289, 0.0
  %v1425 = vadd.f32 %v1288, %v1424
  %1426 = vadd.xlane.f32.xlu0 %v1425
  %v1427 = vpop.xlane.xlu0 %1426
  %v1428 = vsel %vm951, %v1291, 0.0
  %v1429 = vadd.f32 %v1290, %v1428
  %1430 = vadd.xlane.f32.xlu0 %v1429
  %v1431 = vpop.xlane.xlu0 %1430
  %v1432 = vsel %vm951, %v1293, 0.0
  %v1433 = vadd.f32 %v1292, %v1432
  %1434 = vadd.xlane.f32.xlu0 %v1433
  %v1435 = vpop.xlane.xlu0 %1434
  %v1436 = vsel %vm951, %v1295, 0.0
  %v1437 = vadd.f32 %v1294, %v1436
  %1438 = vadd.xlane.f32.xlu0 %v1437
  %v1439 = vpop.xlane.xlu0 %1438
  %v1440 = vsel %vm951, %v1297, 0.0
  %v1441 = vadd.f32 %v1296, %v1440
  %1442 = vadd.xlane.f32.xlu0 %v1441
  %v1443 = vpop.xlane.xlu0 %1442
  %v1444 = vsel %vm951, %v1299, 0.0
  %v1445 = vadd.f32 %v1298, %v1444
  %1446 = vadd.xlane.f32.xlu0 %v1445
  %v1447 = vpop.xlane.xlu0 %1446
  %v1448 = vsel %vm951, %v1301, 0.0
  %v1449 = vadd.f32 %v1300, %v1448
  %1450 = vadd.xlane.f32.xlu0 %v1449
  %v1451 = vpop.xlane.xlu0 %1450
  %v1452 = vsel %vm951, %v1303, 0.0
  %v1453 = vadd.f32 %v1302, %v1452
  %1454 = vadd.xlane.f32.xlu0 %v1453
  %v1455 = vpop.xlane.xlu0 %1454
  %v1456 = vsel %vm951, %v1305, 0.0
  %v1457 = vadd.f32 %v1304, %v1456
  %1458 = vadd.xlane.f32.xlu0 %v1457
  %v1459 = vpop.xlane.xlu0 %1458
  %v1460 = vsel %vm951, %v1307, 0.0
  %v1461 = vadd.f32 %v1306, %v1460
  %1462 = vadd.xlane.f32.xlu0 %v1461
  %v1463 = vpop.xlane.xlu0 %1462
  %v1464 = vsel %vm951, %v1309, 0.0
  %v1465 = vadd.f32 %v1308, %v1464
  %1466 = vadd.xlane.f32.xlu0 %v1465
  %v1467 = vpop.xlane.xlu0 %1466
  %v1468 = vsel %vm951, %v1311, 0.0
  %v1469 = vadd.f32 %v1310, %v1468
  %1470 = vadd.xlane.f32.xlu0 %v1469
  %v1471 = vpop.xlane.xlu0 %1470
  %v1472 = vmul.f32 %v1315, 0.0051020407
  %v1473 = vmul.f32 %v1319, 0.0051020407
  %v1474 = vmul.f32 %v1323, 0.0051020407
  %v1475 = vmul.f32 %v1327, 0.0051020407
  %v1476 = vmul.f32 %v1331, 0.0051020407
  %v1477 = vmul.f32 %v1335, 0.0051020407
  %v1478 = vmul.f32 %v1339, 0.0051020407
  %v1479 = vmul.f32 %v1343, 0.0051020407
  %v1480 = vmul.f32 %v1347, 0.0051020407
  %v1481 = vmul.f32 %v1351, 0.0051020407
  %v1482 = vmul.f32 %v1355, 0.0051020407
  %v1483 = vmul.f32 %v1359, 0.0051020407
  %v1484 = vmul.f32 %v1363, 0.0051020407
  %v1485 = vmul.f32 %v1367, 0.0051020407
  %v1486 = vmul.f32 %v1371, 0.0051020407
  %v1487 = vmul.f32 %v1375, 0.0051020407
  %v1488 = vmul.f32 %v1379, 0.0051020407
  %v1489 = vmul.f32 %v1383, 0.0051020407
  %v1490 = vmul.f32 %v1387, 0.0051020407
  %v1491 = vmul.f32 %v1391, 0.0051020407
  %v1492 = vmul.f32 %v1395, 0.0051020407
  %v1493 = vmul.f32 %v1399, 0.0051020407
  %v1494 = vmul.f32 %v1403, 0.0051020407
  %v1495 = vmul.f32 %v1407, 0.0051020407
  %v1496 = vmul.f32 %v1411, 0.0051020407
  %v1497 = vmul.f32 %v1415, 0.0051020407
  %v1498 = vmul.f32 %v1419, 0.0051020407
  %v1499 = vmul.f32 %v1423, 0.0051020407
  %v1500 = vmul.f32 %v1427, 0.0051020407
  %v1501 = vmul.f32 %v1431, 0.0051020407
  %v1502 = vmul.f32 %v1435, 0.0051020407
  %v1503 = vmul.f32 %v1439, 0.0051020407
  %v1504 = vmul.f32 %v1443, 0.0051020407
  %v1505 = vmul.f32 %v1447, 0.0051020407
  %v1506 = vmul.f32 %v1451, 0.0051020407
  %v1507 = vmul.f32 %v1455, 0.0051020407
  %v1508 = vmul.f32 %v1459, 0.0051020407
  %v1509 = vmul.f32 %v1463, 0.0051020407
  %v1510 = vmul.f32 %v1467, 0.0051020407
  %v1511 = vmul.f32 %v1471, 0.0051020407
  %v1512 = vld [vmem:[%s2] sm:$0xff]
  %v1513 = vld [vmem:[%s2 + $0x8] sm:$0xff]
  %v1514 = vld [vmem:[%s2 + $0x10] sm:$0xff]
  %v1515 = vld [vmem:[%s2 + $0x18] sm:$0xff]
  %v1516 = vld [vmem:[%s2 + $0x20] sm:$0xff]
  %v1517 = vld [vmem:[%s2 + $0x28] sm:$0xff]
  %v1518 = vld [vmem:[%s2 + $0x30] sm:$0xff]
  %v1519 = vld [vmem:[%s2 + $0x38] sm:$0xff]
  %v1520 = vld [vmem:[%s2 + $0x40] sm:$0xff]
  %v1521 = vld [vmem:[%s2 + $0x48] sm:$0xff]
  %v1522 = vld [vmem:[%s2 + $0x50] sm:$0xff]
  %v1523 = vld [vmem:[%s2 + $0x58] sm:$0xff]
  %v1524 = vld [vmem:[%s2 + $0x60] sm:$0xff]
  %v1525 = vld [vmem:[%s2 + $0x68] sm:$0xff]
  %v1526 = vld [vmem:[%s2 + $0x70] sm:$0xff]
  %v1527 = vld [vmem:[%s2 + $0x78] sm:$0xff]
  %v1528 = vld [vmem:[%s2 + $0x80] sm:$0xff]
  %v1529 = vld [vmem:[%s2 + $0x88] sm:$0xff]
  %v1530 = vld [vmem:[%s2 + $0x90] sm:$0xff]
  %v1531 = vld [vmem:[%s2 + $0x98] sm:$0xff]
  %v1532 = vld [vmem:[%s2 + $0xa0] sm:$0xff]
  %v1533 = vld [vmem:[%s2 + $0xa8] sm:$0xff]
  %v1534 = vld [vmem:[%s2 + $0xb0] sm:$0xff]
  %v1535 = vld [vmem:[%s2 + $0xb8] sm:$0xff]
  %v1536 = vld [vmem:[%s2 + $0xc0] sm:$0xff]
  %v1537 = vld [vmem:[%s2 + $0xc8] sm:$0xff]
  %v1538 = vld [vmem:[%s2 + $0xd0] sm:$0xff]
  %v1539 = vld [vmem:[%s2 + $0xd8] sm:$0xff]
  %v1540 = vld [vmem:[%s2 + $0xe0] sm:$0xff]
  %v1541 = vld [vmem:[%s2 + $0xe8] sm:$0xff]
  %v1542 = vld [vmem:[%s2 + $0xf0] sm:$0xff]
  %v1543 = vld [vmem:[%s2 + $0xf8] sm:$0xff]
  %v1544 = vld [vmem:[%s2 + $0x100] sm:$0xff]
  %v1545 = vld [vmem:[%s2 + $0x108] sm:$0xff]
  %v1546 = vld [vmem:[%s2 + $0x110] sm:$0xff]
  %v1547 = vld [vmem:[%s2 + $0x118] sm:$0xff]
  %v1548 = vld [vmem:[%s2 + $0x120] sm:$0xff]
  %v1549 = vld [vmem:[%s2 + $0x128] sm:$0xff]
  %v1550 = vld [vmem:[%s2 + $0x130] sm:$0xff]
  %v1551 = vld [vmem:[%s2 + $0x138] sm:$0xff]
  %v1552 = vadd.f32 %v1472, 1e-05
  %v1553 = vadd.f32 %v1473, 1e-05
  %v1554 = vadd.f32 %v1474, 1e-05
  %v1555 = vadd.f32 %v1475, 1e-05
  %v1556 = vadd.f32 %v1476, 1e-05
  %v1557 = vadd.f32 %v1477, 1e-05
  %v1558 = vadd.f32 %v1478, 1e-05
  %v1559 = vadd.f32 %v1479, 1e-05
  %v1560 = vadd.f32 %v1480, 1e-05
  %v1561 = vadd.f32 %v1481, 1e-05
  %v1562 = vadd.f32 %v1482, 1e-05
  %v1563 = vadd.f32 %v1483, 1e-05
  %v1564 = vadd.f32 %v1484, 1e-05
  %v1565 = vadd.f32 %v1485, 1e-05
  %v1566 = vadd.f32 %v1486, 1e-05
  %v1567 = vadd.f32 %v1487, 1e-05
  %v1568 = vadd.f32 %v1488, 1e-05
  %v1569 = vadd.f32 %v1489, 1e-05
  %v1570 = vadd.f32 %v1490, 1e-05
  %v1571 = vadd.f32 %v1491, 1e-05
  %v1572 = vadd.f32 %v1492, 1e-05
  %v1573 = vadd.f32 %v1493, 1e-05
  %v1574 = vadd.f32 %v1494, 1e-05
  %v1575 = vadd.f32 %v1495, 1e-05
  %v1576 = vadd.f32 %v1496, 1e-05
  %v1577 = vadd.f32 %v1497, 1e-05
  %v1578 = vadd.f32 %v1498, 1e-05
  %v1579 = vadd.f32 %v1499, 1e-05
  %v1580 = vadd.f32 %v1500, 1e-05
  %v1581 = vadd.f32 %v1501, 1e-05
  %v1582 = vadd.f32 %v1502, 1e-05
  %v1583 = vadd.f32 %v1503, 1e-05
  %v1584 = vadd.f32 %v1504, 1e-05
  %v1585 = vadd.f32 %v1505, 1e-05
  %v1586 = vadd.f32 %v1506, 1e-05
  %v1587 = vadd.f32 %v1507, 1e-05
  %v1588 = vadd.f32 %v1508, 1e-05
  %v1589 = vadd.f32 %v1509, 1e-05
  %v1590 = vadd.f32 %v1510, 1e-05
  %v1591 = vadd.f32 %v1511, 1e-05
  %v1592 = vrsqrt.pop %v1552
  %v1593 = vrsqrt.pop %v1553
  %v1594 = vrsqrt.pop %v1554
  %v1595 = vrsqrt.pop %v1555
  %v1596 = vrsqrt.pop %v1556
  %v1597 = vrsqrt.pop %v1557
  %v1598 = vrsqrt.pop %v1558
  %v1599 = vrsqrt.pop %v1559
  %v1600 = vrsqrt.pop %v1560
  %v1601 = vrsqrt.pop %v1561
  %v1602 = vrsqrt.pop %v1562
  %v1603 = vrsqrt.pop %v1563
  %v1604 = vrsqrt.pop %v1564
  %v1605 = vrsqrt.pop %v1565
  %v1606 = vrsqrt.pop %v1566
  %v1607 = vrsqrt.pop %v1567
  %v1608 = vrsqrt.pop %v1568
  %v1609 = vrsqrt.pop %v1569
  %v1610 = vrsqrt.pop %v1570
  %v1611 = vrsqrt.pop %v1571
  %v1612 = vrsqrt.pop %v1572
  %v1613 = vrsqrt.pop %v1573
  %v1614 = vrsqrt.pop %v1574
  %v1615 = vrsqrt.pop %v1575
  %v1616 = vrsqrt.pop %v1576
  %v1617 = vrsqrt.pop %v1577
  %v1618 = vrsqrt.pop %v1578
  %v1619 = vrsqrt.pop %v1579
  %v1620 = vrsqrt.pop %v1580
  %v1621 = vrsqrt.pop %v1581
  %v1622 = vrsqrt.pop %v1582
  %v1623 = vrsqrt.pop %v1583
  %v1624 = vrsqrt.pop %v1584
  %v1625 = vrsqrt.pop %v1585
  %v1626 = vrsqrt.pop %v1586
  %v1627 = vrsqrt.pop %v1587
  %v1628 = vrsqrt.pop %v1588
  %v1629 = vrsqrt.pop %v1589
  %v1630 = vrsqrt.pop %v1590
  %v1631 = vrsqrt.pop %v1591
  %v1632 = vmul.f32 %v1512, %v1592
  %v1633 = vmul.f32 %v1513, %v1593
  %v1634 = vmul.f32 %v1514, %v1594
  %v1635 = vmul.f32 %v1515, %v1595
  %v1636 = vmul.f32 %v1516, %v1596
  %v1637 = vmul.f32 %v1517, %v1597
  %v1638 = vmul.f32 %v1518, %v1598
  %v1639 = vmul.f32 %v1519, %v1599
  %v1640 = vmul.f32 %v1520, %v1600
  %v1641 = vmul.f32 %v1521, %v1601
  %v1642 = vmul.f32 %v1522, %v1602
  %v1643 = vmul.f32 %v1523, %v1603
  %v1644 = vmul.f32 %v1524, %v1604
  %v1645 = vmul.f32 %v1525, %v1605
  %v1646 = vmul.f32 %v1526, %v1606
  %v1647 = vmul.f32 %v1527, %v1607
  %v1648 = vmul.f32 %v1528, %v1608
  %v1649 = vmul.f32 %v1529, %v1609
  %v1650 = vmul.f32 %v1530, %v1610
  %v1651 = vmul.f32 %v1531, %v1611
  %v1652 = vmul.f32 %v1532, %v1612
  %v1653 = vmul.f32 %v1533, %v1613
  %v1654 = vmul.f32 %v1534, %v1614
  %v1655 = vmul.f32 %v1535, %v1615
  %v1656 = vmul.f32 %v1536, %v1616
  %v1657 = vmul.f32 %v1537, %v1617
  %v1658 = vmul.f32 %v1538, %v1618
  %v1659 = vmul.f32 %v1539, %v1619
  %v1660 = vmul.f32 %v1540, %v1620
  %v1661 = vmul.f32 %v1541, %v1621
  %v1662 = vmul.f32 %v1542, %v1622
  %v1663 = vmul.f32 %v1543, %v1623
  %v1664 = vmul.f32 %v1544, %v1624
  %v1665 = vmul.f32 %v1545, %v1625
  %v1666 = vmul.f32 %v1546, %v1626
  %v1667 = vmul.f32 %v1547, %v1627
  %v1668 = vmul.f32 %v1548, %v1628
  %v1669 = vmul.f32 %v1549, %v1629
  %v1670 = vmul.f32 %v1550, %v1630
  %v1671 = vmul.f32 %v1551, %v1631
  %v1672 = vld [vmem:[%s4] sm:$0xff]
  %v1673 = vld [vmem:[%s4 + $0x8] sm:$0xff]
  %v1674 = vld [vmem:[%s4 + $0x10] sm:$0xff]
  %v1675 = vld [vmem:[%s4 + $0x18] sm:$0xff]
  %v1676 = vld [vmem:[%s4 + $0x20] sm:$0xff]
  %v1677 = vld [vmem:[%s4 + $0x28] sm:$0xff]
  %v1678 = vld [vmem:[%s4 + $0x30] sm:$0xff]
  %v1679 = vld [vmem:[%s4 + $0x38] sm:$0xff]
  %v1680 = vld [vmem:[%s4 + $0x40] sm:$0xff]
  %v1681 = vld [vmem:[%s4 + $0x48] sm:$0xff]
  %v1682 = vld [vmem:[%s4 + $0x50] sm:$0xff]
  %v1683 = vld [vmem:[%s4 + $0x58] sm:$0xff]
  %v1684 = vld [vmem:[%s4 + $0x60] sm:$0xff]
  %v1685 = vld [vmem:[%s4 + $0x68] sm:$0xff]
  %v1686 = vld [vmem:[%s4 + $0x70] sm:$0xff]
  %v1687 = vld [vmem:[%s4 + $0x78] sm:$0xff]
  %v1688 = vld [vmem:[%s4 + $0x80] sm:$0xff]
  %v1689 = vld [vmem:[%s4 + $0x88] sm:$0xff]
  %v1690 = vld [vmem:[%s4 + $0x90] sm:$0xff]
  %v1691 = vld [vmem:[%s4 + $0x98] sm:$0xff]
  %v1692 = vld [vmem:[%s4 + $0xa0] sm:$0xff]
  %v1693 = vld [vmem:[%s4 + $0xa8] sm:$0xff]
  %v1694 = vld [vmem:[%s4 + $0xb0] sm:$0xff]
  %v1695 = vld [vmem:[%s4 + $0xb8] sm:$0xff]
  %v1696 = vld [vmem:[%s4 + $0xc0] sm:$0xff]
  %v1697 = vld [vmem:[%s4 + $0xc8] sm:$0xff]
  %v1698 = vld [vmem:[%s4 + $0xd0] sm:$0xff]
  %v1699 = vld [vmem:[%s4 + $0xd8] sm:$0xff]
  %v1700 = vld [vmem:[%s4 + $0xe0] sm:$0xff]
  %v1701 = vld [vmem:[%s4 + $0xe8] sm:$0xff]
  %v1702 = vld [vmem:[%s4 + $0xf0] sm:$0xff]
  %v1703 = vld [vmem:[%s4 + $0xf8] sm:$0xff]
  %v1704 = vld [vmem:[%s4 + $0x100] sm:$0xff]
  %v1705 = vld [vmem:[%s4 + $0x108] sm:$0xff]
  %v1706 = vld [vmem:[%s4 + $0x110] sm:$0xff]
  %v1707 = vld [vmem:[%s4 + $0x118] sm:$0xff]
  %v1708 = vld [vmem:[%s4 + $0x120] sm:$0xff]
  %v1709 = vld [vmem:[%s4 + $0x128] sm:$0xff]
  %v1710 = vld [vmem:[%s4 + $0x130] sm:$0xff]
  %v1711 = vld [vmem:[%s4 + $0x138] sm:$0xff]
  %v1712 = vld [vmem:[%s4 + $0x140] sm:$0xff]
  %v1713 = vld [vmem:[%s4 + $0x148] sm:$0xff]
  %v1714 = vld [vmem:[%s4 + $0x150] sm:$0xff]
  %v1715 = vld [vmem:[%s4 + $0x158] sm:$0xff]
  %v1716 = vld [vmem:[%s4 + $0x160] sm:$0xff]
  %v1717 = vld [vmem:[%s4 + $0x168] sm:$0xff]
  %v1718 = vld [vmem:[%s4 + $0x170] sm:$0xff]
  %v1719 = vld [vmem:[%s4 + $0x178] sm:$0xff]
  %v1720 = vld [vmem:[%s4 + $0x180] sm:$0xff]
  %v1721 = vld [vmem:[%s4 + $0x188] sm:$0xff]
  %v1722 = vld [vmem:[%s4 + $0x190] sm:$0xff]
  %v1723 = vld [vmem:[%s4 + $0x198] sm:$0xff]
  %v1724 = vld [vmem:[%s4 + $0x1a0] sm:$0xff]
  %v1725 = vld [vmem:[%s4 + $0x1a8] sm:$0xff]
  %v1726 = vld [vmem:[%s4 + $0x1b0] sm:$0xff]
  %v1727 = vld [vmem:[%s4 + $0x1b8] sm:$0xff]
  %v1728 = vld [vmem:[%s4 + $0x1c0] sm:$0xff]
  %v1729 = vld [vmem:[%s4 + $0x1c8] sm:$0xff]
  %v1730 = vld [vmem:[%s4 + $0x1d0] sm:$0xff]
  %v1731 = vld [vmem:[%s4 + $0x1d8] sm:$0xff]
  %v1732 = vld [vmem:[%s4 + $0x1e0] sm:$0xff]
  %v1733 = vld [vmem:[%s4 + $0x1e8] sm:$0xff]
  %v1734 = vld [vmem:[%s4 + $0x1f0] sm:$0xff]
  %v1735 = vld [vmem:[%s4 + $0x1f8] sm:$0xff]
  %v1736 = vld [vmem:[%s4 + $0x200] sm:$0xff]
  %v1737 = vld [vmem:[%s4 + $0x208] sm:$0xff]
  %v1738 = vld [vmem:[%s4 + $0x210] sm:$0xff]
  %v1739 = vld [vmem:[%s4 + $0x218] sm:$0xff]
  %v1740 = vld [vmem:[%s4 + $0x220] sm:$0xff]
  %v1741 = vld [vmem:[%s4 + $0x228] sm:$0xff]
  %v1742 = vld [vmem:[%s4 + $0x230] sm:$0xff]
  %v1743 = vld [vmem:[%s4 + $0x238] sm:$0xff]
  %v1744 = vld [vmem:[%s4 + $0x240] sm:$0xff]
  %v1745 = vld [vmem:[%s4 + $0x248] sm:$0xff]
  %v1746 = vld [vmem:[%s4 + $0x250] sm:$0xff]
  %v1747 = vld [vmem:[%s4 + $0x258] sm:$0xff]
  %v1748 = vld [vmem:[%s4 + $0x260] sm:$0xff]
  %v1749 = vld [vmem:[%s4 + $0x268] sm:$0xff]
  %v1750 = vld [vmem:[%s4 + $0x270] sm:$0xff]
  %v1751 = vld [vmem:[%s4 + $0x278] sm:$0xff]
  %1753 = vset.pattern.permute.xlu0 0
  %1754 = vperm.xlu0 %1753, %v1632
  %v1755 = vpop.permute.xlu0 %1754
  %1758 = vset.pattern.permute.xlu0 0
  %1759 = vperm.xlu0 %1758, %v1633
  %v1760 = vpop.permute.xlu0 %1759
  %1763 = vset.pattern.permute.xlu0 0
  %1764 = vperm.xlu0 %1763, %v1634
  %v1765 = vpop.permute.xlu0 %1764
  %1768 = vset.pattern.permute.xlu0 0
  %1769 = vperm.xlu0 %1768, %v1635
  %v1770 = vpop.permute.xlu0 %1769
  %1773 = vset.pattern.permute.xlu0 0
  %1774 = vperm.xlu0 %1773, %v1636
  %v1775 = vpop.permute.xlu0 %1774
  %1778 = vset.pattern.permute.xlu0 0
  %1779 = vperm.xlu0 %1778, %v1637
  %v1780 = vpop.permute.xlu0 %1779
  %1783 = vset.pattern.permute.xlu0 0
  %1784 = vperm.xlu0 %1783, %v1638
  %v1785 = vpop.permute.xlu0 %1784
  %1788 = vset.pattern.permute.xlu0 0
  %1789 = vperm.xlu0 %1788, %v1639
  %v1790 = vpop.permute.xlu0 %1789
  %1793 = vset.pattern.permute.xlu0 0
  %1794 = vperm.xlu0 %1793, %v1640
  %v1795 = vpop.permute.xlu0 %1794
  %1798 = vset.pattern.permute.xlu0 0
  %1799 = vperm.xlu0 %1798, %v1641
  %v1800 = vpop.permute.xlu0 %1799
  %1803 = vset.pattern.permute.xlu0 0
  %1804 = vperm.xlu0 %1803, %v1642
  %v1805 = vpop.permute.xlu0 %1804
  %1808 = vset.pattern.permute.xlu0 0
  %1809 = vperm.xlu0 %1808, %v1643
  %v1810 = vpop.permute.xlu0 %1809
  %1813 = vset.pattern.permute.xlu0 0
  %1814 = vperm.xlu0 %1813, %v1644
  %v1815 = vpop.permute.xlu0 %1814
  %1818 = vset.pattern.permute.xlu0 0
  %1819 = vperm.xlu0 %1818, %v1645
  %v1820 = vpop.permute.xlu0 %1819
  %1823 = vset.pattern.permute.xlu0 0
  %1824 = vperm.xlu0 %1823, %v1646
  %v1825 = vpop.permute.xlu0 %1824
  %1828 = vset.pattern.permute.xlu0 0
  %1829 = vperm.xlu0 %1828, %v1647
  %v1830 = vpop.permute.xlu0 %1829
  %1833 = vset.pattern.permute.xlu0 0
  %1834 = vperm.xlu0 %1833, %v1648
  %v1835 = vpop.permute.xlu0 %1834
  %1838 = vset.pattern.permute.xlu0 0
  %1839 = vperm.xlu0 %1838, %v1649
  %v1840 = vpop.permute.xlu0 %1839
  %1843 = vset.pattern.permute.xlu0 0
  %1844 = vperm.xlu0 %1843, %v1650
  %v1845 = vpop.permute.xlu0 %1844
  %1848 = vset.pattern.permute.xlu0 0
  %1849 = vperm.xlu0 %1848, %v1651
  %v1850 = vpop.permute.xlu0 %1849
  %1853 = vset.pattern.permute.xlu0 0
  %1854 = vperm.xlu0 %1853, %v1652
  %v1855 = vpop.permute.xlu0 %1854
  %1858 = vset.pattern.permute.xlu0 0
  %1859 = vperm.xlu0 %1858, %v1653
  %v1860 = vpop.permute.xlu0 %1859
  %1863 = vset.pattern.permute.xlu0 0
  %1864 = vperm.xlu0 %1863, %v1654
  %v1865 = vpop.permute.xlu0 %1864
  %1868 = vset.pattern.permute.xlu0 0
  %1869 = vperm.xlu0 %1868, %v1655
  %v1870 = vpop.permute.xlu0 %1869
  %1873 = vset.pattern.permute.xlu0 0
  %1874 = vperm.xlu0 %1873, %v1656
  %v1875 = vpop.permute.xlu0 %1874
  %1878 = vset.pattern.permute.xlu0 0
  %1879 = vperm.xlu0 %1878, %v1657
  %v1880 = vpop.permute.xlu0 %1879
  %1883 = vset.pattern.permute.xlu0 0
  %1884 = vperm.xlu0 %1883, %v1658
  %v1885 = vpop.permute.xlu0 %1884
  %1888 = vset.pattern.permute.xlu0 0
  %1889 = vperm.xlu0 %1888, %v1659
  %v1890 = vpop.permute.xlu0 %1889
  %1893 = vset.pattern.permute.xlu0 0
  %1894 = vperm.xlu0 %1893, %v1660
  %v1895 = vpop.permute.xlu0 %1894
  %1898 = vset.pattern.permute.xlu0 0
  %1899 = vperm.xlu0 %1898, %v1661
  %v1900 = vpop.permute.xlu0 %1899
  %1903 = vset.pattern.permute.xlu0 0
  %1904 = vperm.xlu0 %1903, %v1662
  %v1905 = vpop.permute.xlu0 %1904
  %1908 = vset.pattern.permute.xlu0 0
  %1909 = vperm.xlu0 %1908, %v1663
  %v1910 = vpop.permute.xlu0 %1909
  %1913 = vset.pattern.permute.xlu0 0
  %1914 = vperm.xlu0 %1913, %v1664
  %v1915 = vpop.permute.xlu0 %1914
  %1918 = vset.pattern.permute.xlu0 0
  %1919 = vperm.xlu0 %1918, %v1665
  %v1920 = vpop.permute.xlu0 %1919
  %1923 = vset.pattern.permute.xlu0 0
  %1924 = vperm.xlu0 %1923, %v1666
  %v1925 = vpop.permute.xlu0 %1924
  %1928 = vset.pattern.permute.xlu0 0
  %1929 = vperm.xlu0 %1928, %v1667
  %v1930 = vpop.permute.xlu0 %1929
  %1933 = vset.pattern.permute.xlu0 0
  %1934 = vperm.xlu0 %1933, %v1668
  %v1935 = vpop.permute.xlu0 %1934
  %1938 = vset.pattern.permute.xlu0 0
  %1939 = vperm.xlu0 %1938, %v1669
  %v1940 = vpop.permute.xlu0 %1939
  %1943 = vset.pattern.permute.xlu0 0
  %1944 = vperm.xlu0 %1943, %v1670
  %v1945 = vpop.permute.xlu0 %1944
  %1948 = vset.pattern.permute.xlu0 0
  %1949 = vperm.xlu0 %1948, %v1671
  %v1950 = vpop.permute.xlu0 %1949
  %v1952 = vmul.f32 %v1152, %v1755
  %v1953 = vmul.f32 %v1153, %v1755
  %v1954 = vmul.f32 %v1154, %v1760
  %v1955 = vmul.f32 %v1155, %v1760
  %v1956 = vmul.f32 %v1156, %v1765
  %v1957 = vmul.f32 %v1157, %v1765
  %v1958 = vmul.f32 %v1158, %v1770
  %v1959 = vmul.f32 %v1159, %v1770
  %v1960 = vmul.f32 %v1160, %v1775
  %v1961 = vmul.f32 %v1161, %v1775
  %v1962 = vmul.f32 %v1162, %v1780
  %v1963 = vmul.f32 %v1163, %v1780
  %v1964 = vmul.f32 %v1164, %v1785
  %v1965 = vmul.f32 %v1165, %v1785
  %v1966 = vmul.f32 %v1166, %v1790
  %v1967 = vmul.f32 %v1167, %v1790
  %v1968 = vmul.f32 %v1168, %v1795
  %v1969 = vmul.f32 %v1169, %v1795
  %v1970 = vmul.f32 %v1170, %v1800
  %v1971 = vmul.f32 %v1171, %v1800
  %v1972 = vmul.f32 %v1172, %v1805
  %v1973 = vmul.f32 %v1173, %v1805
  %v1974 = vmul.f32 %v1174, %v1810
  %v1975 = vmul.f32 %v1175, %v1810
  %v1976 = vmul.f32 %v1176, %v1815
  %v1977 = vmul.f32 %v1177, %v1815
  %v1978 = vmul.f32 %v1178, %v1820
  %v1979 = vmul.f32 %v1179, %v1820
  %v1980 = vmul.f32 %v1180, %v1825
  %v1981 = vmul.f32 %v1181, %v1825
  %v1982 = vmul.f32 %v1182, %v1830
  %v1983 = vmul.f32 %v1183, %v1830
  %v1984 = vmul.f32 %v1184, %v1835
  %v1985 = vmul.f32 %v1185, %v1835
  %v1986 = vmul.f32 %v1186, %v1840
  %v1987 = vmul.f32 %v1187, %v1840
  %v1988 = vmul.f32 %v1188, %v1845
  %v1989 = vmul.f32 %v1189, %v1845
  %v1990 = vmul.f32 %v1190, %v1850
  %v1991 = vmul.f32 %v1191, %v1850
  %v1992 = vmul.f32 %v1192, %v1855
  %v1993 = vmul.f32 %v1193, %v1855
  %v1994 = vmul.f32 %v1194, %v1860
  %v1995 = vmul.f32 %v1195, %v1860
  %v1996 = vmul.f32 %v1196, %v1865
  %v1997 = vmul.f32 %v1197, %v1865
  %v1998 = vmul.f32 %v1198, %v1870
  %v1999 = vmul.f32 %v1199, %v1870
  %v2000 = vmul.f32 %v1200, %v1875
  %v2001 = vmul.f32 %v1201, %v1875
  %v2002 = vmul.f32 %v1202, %v1880
  %v2003 = vmul.f32 %v1203, %v1880
  %v2004 = vmul.f32 %v1204, %v1885
  %v2005 = vmul.f32 %v1205, %v1885
  %v2006 = vmul.f32 %v1206, %v1890
  %v2007 = vmul.f32 %v1207, %v1890
  %v2008 = vmul.f32 %v1208, %v1895
  %v2009 = vmul.f32 %v1209, %v1895
  %v2010 = vmul.f32 %v1210, %v1900
  %v2011 = vmul.f32 %v1211, %v1900
  %v2012 = vmul.f32 %v1212, %v1905
  %v2013 = vmul.f32 %v1213, %v1905
  %v2014 = vmul.f32 %v1214, %v1910
  %v2015 = vmul.f32 %v1215, %v1910
  %v2016 = vmul.f32 %v1216, %v1915
  %v2017 = vmul.f32 %v1217, %v1915
  %v2018 = vmul.f32 %v1218, %v1920
  %v2019 = vmul.f32 %v1219, %v1920
  %v2020 = vmul.f32 %v1220, %v1925
  %v2021 = vmul.f32 %v1221, %v1925
  %v2022 = vmul.f32 %v1222, %v1930
  %v2023 = vmul.f32 %v1223, %v1930
  %v2024 = vmul.f32 %v1224, %v1935
  %v2025 = vmul.f32 %v1225, %v1935
  %v2026 = vmul.f32 %v1226, %v1940
  %v2027 = vmul.f32 %v1227, %v1940
  %v2028 = vmul.f32 %v1228, %v1945
  %v2029 = vmul.f32 %v1229, %v1945
  %v2030 = vmul.f32 %v1230, %v1950
  %v2031 = vmul.f32 %v1231, %v1950
  %v2032 = vadd.f32 %v1672, %v1952
  %v2033 = vadd.f32 %v1673, %v1953
  %v2034 = vadd.f32 %v1674, %v1954
  %v2035 = vadd.f32 %v1675, %v1955
  %v2036 = vadd.f32 %v1676, %v1956
  %v2037 = vadd.f32 %v1677, %v1957
  %v2038 = vadd.f32 %v1678, %v1958
  %v2039 = vadd.f32 %v1679, %v1959
  %v2040 = vadd.f32 %v1680, %v1960
  %v2041 = vadd.f32 %v1681, %v1961
  %v2042 = vadd.f32 %v1682, %v1962
  %v2043 = vadd.f32 %v1683, %v1963
  %v2044 = vadd.f32 %v1684, %v1964
  %v2045 = vadd.f32 %v1685, %v1965
  %v2046 = vadd.f32 %v1686, %v1966
  %v2047 = vadd.f32 %v1687, %v1967
  %v2048 = vadd.f32 %v1688, %v1968
  %v2049 = vadd.f32 %v1689, %v1969
  %v2050 = vadd.f32 %v1690, %v1970
  %v2051 = vadd.f32 %v1691, %v1971
  %v2052 = vadd.f32 %v1692, %v1972
  %v2053 = vadd.f32 %v1693, %v1973
  %v2054 = vadd.f32 %v1694, %v1974
  %v2055 = vadd.f32 %v1695, %v1975
  %v2056 = vadd.f32 %v1696, %v1976
  %v2057 = vadd.f32 %v1697, %v1977
  %v2058 = vadd.f32 %v1698, %v1978
  %v2059 = vadd.f32 %v1699, %v1979
  %v2060 = vadd.f32 %v1700, %v1980
  %v2061 = vadd.f32 %v1701, %v1981
  %v2062 = vadd.f32 %v1702, %v1982
  %v2063 = vadd.f32 %v1703, %v1983
  %v2064 = vadd.f32 %v1704, %v1984
  %v2065 = vadd.f32 %v1705, %v1985
  %v2066 = vadd.f32 %v1706, %v1986
  %v2067 = vadd.f32 %v1707, %v1987
  %v2068 = vadd.f32 %v1708, %v1988
  %v2069 = vadd.f32 %v1709, %v1989
  %v2070 = vadd.f32 %v1710, %v1990
  %v2071 = vadd.f32 %v1711, %v1991
  %v2072 = vadd.f32 %v1712, %v1992
  %v2073 = vadd.f32 %v1713, %v1993
  %v2074 = vadd.f32 %v1714, %v1994
  %v2075 = vadd.f32 %v1715, %v1995
  %v2076 = vadd.f32 %v1716, %v1996
  %v2077 = vadd.f32 %v1717, %v1997
  %v2078 = vadd.f32 %v1718, %v1998
  %v2079 = vadd.f32 %v1719, %v1999
  %v2080 = vadd.f32 %v1720, %v2000
  %v2081 = vadd.f32 %v1721, %v2001
  %v2082 = vadd.f32 %v1722, %v2002
  %v2083 = vadd.f32 %v1723, %v2003
  %v2084 = vadd.f32 %v1724, %v2004
  %v2085 = vadd.f32 %v1725, %v2005
  %v2086 = vadd.f32 %v1726, %v2006
  %v2087 = vadd.f32 %v1727, %v2007
  %v2088 = vadd.f32 %v1728, %v2008
  %v2089 = vadd.f32 %v1729, %v2009
  %v2090 = vadd.f32 %v1730, %v2010
  %v2091 = vadd.f32 %v1731, %v2011
  %v2092 = vadd.f32 %v1732, %v2012
  %v2093 = vadd.f32 %v1733, %v2013
  %v2094 = vadd.f32 %v1734, %v2014
  %v2095 = vadd.f32 %v1735, %v2015
  %v2096 = vadd.f32 %v1736, %v2016
  %v2097 = vadd.f32 %v1737, %v2017
  %v2098 = vadd.f32 %v1738, %v2018
  %v2099 = vadd.f32 %v1739, %v2019
  %v2100 = vadd.f32 %v1740, %v2020
  %v2101 = vadd.f32 %v1741, %v2021
  %v2102 = vadd.f32 %v1742, %v2022
  %v2103 = vadd.f32 %v1743, %v2023
  %v2104 = vadd.f32 %v1744, %v2024
  %v2105 = vadd.f32 %v1745, %v2025
  %v2106 = vadd.f32 %v1746, %v2026
  %v2107 = vadd.f32 %v1747, %v2027
  %v2108 = vadd.f32 %v1748, %v2028
  %v2109 = vadd.f32 %v1749, %v2029
  %v2110 = vadd.f32 %v1750, %v2030
  %v2111 = vadd.f32 %v1751, %v2031
  %v2112 = vld [vmem:[%s3] sm:$0xff]
  %v2113 = vld [vmem:[%s3 + $0x8] sm:$0xff]
  %v2114 = vld [vmem:[%s3 + $0x10] sm:$0xff]
  %v2115 = vld [vmem:[%s3 + $0x18] sm:$0xff]
  %v2116 = vld [vmem:[%s3 + $0x20] sm:$0xff]
  %v2117 = vld [vmem:[%s3 + $0x28] sm:$0xff]
  %v2118 = vld [vmem:[%s3 + $0x30] sm:$0xff]
  %v2119 = vld [vmem:[%s3 + $0x38] sm:$0xff]
  %v2120 = vld [vmem:[%s3 + $0x40] sm:$0xff]
  %v2121 = vld [vmem:[%s3 + $0x48] sm:$0xff]
  %v2122 = vld [vmem:[%s3 + $0x50] sm:$0xff]
  %v2123 = vld [vmem:[%s3 + $0x58] sm:$0xff]
  %v2124 = vld [vmem:[%s3 + $0x60] sm:$0xff]
  %v2125 = vld [vmem:[%s3 + $0x68] sm:$0xff]
  %v2126 = vld [vmem:[%s3 + $0x70] sm:$0xff]
  %v2127 = vld [vmem:[%s3 + $0x78] sm:$0xff]
  %v2128 = vld [vmem:[%s3 + $0x80] sm:$0xff]
  %v2129 = vld [vmem:[%s3 + $0x88] sm:$0xff]
  %v2130 = vld [vmem:[%s3 + $0x90] sm:$0xff]
  %v2131 = vld [vmem:[%s3 + $0x98] sm:$0xff]
  %v2132 = vld [vmem:[%s3 + $0xa0] sm:$0xff]
  %v2133 = vld [vmem:[%s3 + $0xa8] sm:$0xff]
  %v2134 = vld [vmem:[%s3 + $0xb0] sm:$0xff]
  %v2135 = vld [vmem:[%s3 + $0xb8] sm:$0xff]
  %v2136 = vld [vmem:[%s3 + $0xc0] sm:$0xff]
  %v2137 = vld [vmem:[%s3 + $0xc8] sm:$0xff]
  %v2138 = vld [vmem:[%s3 + $0xd0] sm:$0xff]
  %v2139 = vld [vmem:[%s3 + $0xd8] sm:$0xff]
  %v2140 = vld [vmem:[%s3 + $0xe0] sm:$0xff]
  %v2141 = vld [vmem:[%s3 + $0xe8] sm:$0xff]
  %v2142 = vld [vmem:[%s3 + $0xf0] sm:$0xff]
  %v2143 = vld [vmem:[%s3 + $0xf8] sm:$0xff]
  %v2144 = vld [vmem:[%s3 + $0x100] sm:$0xff]
  %v2145 = vld [vmem:[%s3 + $0x108] sm:$0xff]
  %v2146 = vld [vmem:[%s3 + $0x110] sm:$0xff]
  %v2147 = vld [vmem:[%s3 + $0x118] sm:$0xff]
  %v2148 = vld [vmem:[%s3 + $0x120] sm:$0xff]
  %v2149 = vld [vmem:[%s3 + $0x128] sm:$0xff]
  %v2150 = vld [vmem:[%s3 + $0x130] sm:$0xff]
  %v2151 = vld [vmem:[%s3 + $0x138] sm:$0xff]
  %2153 = vset.pattern.permute.xlu0 0
  %2154 = vperm.xlu0 %2153, %v2112
  %v2155 = vpop.permute.xlu0 %2154
  %2158 = vset.pattern.permute.xlu0 0
  %2159 = vperm.xlu0 %2158, %v2113
  %v2160 = vpop.permute.xlu0 %2159
  %2163 = vset.pattern.permute.xlu0 0
  %2164 = vperm.xlu0 %2163, %v2114
  %v2165 = vpop.permute.xlu0 %2164
  %2168 = vset.pattern.permute.xlu0 0
  %2169 = vperm.xlu0 %2168, %v2115
  %v2170 = vpop.permute.xlu0 %2169
  %2173 = vset.pattern.permute.xlu0 0
  %2174 = vperm.xlu0 %2173, %v2116
  %v2175 = vpop.permute.xlu0 %2174
  %2178 = vset.pattern.permute.xlu0 0
  %2179 = vperm.xlu0 %2178, %v2117
  %v2180 = vpop.permute.xlu0 %2179
  %2183 = vset.pattern.permute.xlu0 0
  %2184 = vperm.xlu0 %2183, %v2118
  %v2185 = vpop.permute.xlu0 %2184
  %2188 = vset.pattern.permute.xlu0 0
  %2189 = vperm.xlu0 %2188, %v2119
  %v2190 = vpop.permute.xlu0 %2189
  %2193 = vset.pattern.permute.xlu0 0
  %2194 = vperm.xlu0 %2193, %v2120
  %v2195 = vpop.permute.xlu0 %2194
  %2198 = vset.pattern.permute.xlu0 0
  %2199 = vperm.xlu0 %2198, %v2121
  %v2200 = vpop.permute.xlu0 %2199
  %2203 = vset.pattern.permute.xlu0 0
  %2204 = vperm.xlu0 %2203, %v2122
  %v2205 = vpop.permute.xlu0 %2204
  %2208 = vset.pattern.permute.xlu0 0
  %2209 = vperm.xlu0 %2208, %v2123
  %v2210 = vpop.permute.xlu0 %2209
  %2213 = vset.pattern.permute.xlu0 0
  %2214 = vperm.xlu0 %2213, %v2124
  %v2215 = vpop.permute.xlu0 %2214
  %2218 = vset.pattern.permute.xlu0 0
  %2219 = vperm.xlu0 %2218, %v2125
  %v2220 = vpop.permute.xlu0 %2219
  %2223 = vset.pattern.permute.xlu0 0
  %2224 = vperm.xlu0 %2223, %v2126
  %v2225 = vpop.permute.xlu0 %2224
  %2228 = vset.pattern.permute.xlu0 0
  %2229 = vperm.xlu0 %2228, %v2127
  %v2230 = vpop.permute.xlu0 %2229
  %2233 = vset.pattern.permute.xlu0 0
  %2234 = vperm.xlu0 %2233, %v2128
  %v2235 = vpop.permute.xlu0 %2234
  %2238 = vset.pattern.permute.xlu0 0
  %2239 = vperm.xlu0 %2238, %v2129
  %v2240 = vpop.permute.xlu0 %2239
  %2243 = vset.pattern.permute.xlu0 0
  %2244 = vperm.xlu0 %2243, %v2130
  %v2245 = vpop.permute.xlu0 %2244
  %2248 = vset.pattern.permute.xlu0 0
  %2249 = vperm.xlu0 %2248, %v2131
  %v2250 = vpop.permute.xlu0 %2249
  %2253 = vset.pattern.permute.xlu0 0
  %2254 = vperm.xlu0 %2253, %v2132
  %v2255 = vpop.permute.xlu0 %2254
  %2258 = vset.pattern.permute.xlu0 0
  %2259 = vperm.xlu0 %2258, %v2133
  %v2260 = vpop.permute.xlu0 %2259
  %2263 = vset.pattern.permute.xlu0 0
  %2264 = vperm.xlu0 %2263, %v2134
  %v2265 = vpop.permute.xlu0 %2264
  %2268 = vset.pattern.permute.xlu0 0
  %2269 = vperm.xlu0 %2268, %v2135
  %v2270 = vpop.permute.xlu0 %2269
  %2273 = vset.pattern.permute.xlu0 0
  %2274 = vperm.xlu0 %2273, %v2136
  %v2275 = vpop.permute.xlu0 %2274
  %2278 = vset.pattern.permute.xlu0 0
  %2279 = vperm.xlu0 %2278, %v2137
  %v2280 = vpop.permute.xlu0 %2279
  %2283 = vset.pattern.permute.xlu0 0
  %2284 = vperm.xlu0 %2283, %v2138
  %v2285 = vpop.permute.xlu0 %2284
  %2288 = vset.pattern.permute.xlu0 0
  %2289 = vperm.xlu0 %2288, %v2139
  %v2290 = vpop.permute.xlu0 %2289
  %2293 = vset.pattern.permute.xlu0 0
  %2294 = vperm.xlu0 %2293, %v2140
  %v2295 = vpop.permute.xlu0 %2294
  %2298 = vset.pattern.permute.xlu0 0
  %2299 = vperm.xlu0 %2298, %v2141
  %v2300 = vpop.permute.xlu0 %2299
  %2303 = vset.pattern.permute.xlu0 0
  %2304 = vperm.xlu0 %2303, %v2142
  %v2305 = vpop.permute.xlu0 %2304
  %2308 = vset.pattern.permute.xlu0 0
  %2309 = vperm.xlu0 %2308, %v2143
  %v2310 = vpop.permute.xlu0 %2309
  %2313 = vset.pattern.permute.xlu0 0
  %2314 = vperm.xlu0 %2313, %v2144
  %v2315 = vpop.permute.xlu0 %2314
  %2318 = vset.pattern.permute.xlu0 0
  %2319 = vperm.xlu0 %2318, %v2145
  %v2320 = vpop.permute.xlu0 %2319
  %2323 = vset.pattern.permute.xlu0 0
  %2324 = vperm.xlu0 %2323, %v2146
  %v2325 = vpop.permute.xlu0 %2324
  %2328 = vset.pattern.permute.xlu0 0
  %2329 = vperm.xlu0 %2328, %v2147
  %v2330 = vpop.permute.xlu0 %2329
  %2333 = vset.pattern.permute.xlu0 0
  %2334 = vperm.xlu0 %2333, %v2148
  %v2335 = vpop.permute.xlu0 %2334
  %2338 = vset.pattern.permute.xlu0 0
  %2339 = vperm.xlu0 %2338, %v2149
  %v2340 = vpop.permute.xlu0 %2339
  %2343 = vset.pattern.permute.xlu0 0
  %2344 = vperm.xlu0 %2343, %v2150
  %v2345 = vpop.permute.xlu0 %2344
  %2348 = vset.pattern.permute.xlu0 0
  %2349 = vperm.xlu0 %2348, %v2151
  %v2350 = vpop.permute.xlu0 %2349
  %v2352 = vadd.f32 %v2032, %v2155
  %v2353 = vadd.f32 %v2033, %v2155
  %v2354 = vadd.f32 %v2034, %v2160
  %v2355 = vadd.f32 %v2035, %v2160
  %v2356 = vadd.f32 %v2036, %v2165
  %v2357 = vadd.f32 %v2037, %v2165
  %v2358 = vadd.f32 %v2038, %v2170
  %v2359 = vadd.f32 %v2039, %v2170
  %v2360 = vadd.f32 %v2040, %v2175
  %v2361 = vadd.f32 %v2041, %v2175
  %v2362 = vadd.f32 %v2042, %v2180
  %v2363 = vadd.f32 %v2043, %v2180
  %v2364 = vadd.f32 %v2044, %v2185
  %v2365 = vadd.f32 %v2045, %v2185
  %v2366 = vadd.f32 %v2046, %v2190
  %v2367 = vadd.f32 %v2047, %v2190
  %v2368 = vadd.f32 %v2048, %v2195
  %v2369 = vadd.f32 %v2049, %v2195
  %v2370 = vadd.f32 %v2050, %v2200
  %v2371 = vadd.f32 %v2051, %v2200
  %v2372 = vadd.f32 %v2052, %v2205
  %v2373 = vadd.f32 %v2053, %v2205
  %v2374 = vadd.f32 %v2054, %v2210
  %v2375 = vadd.f32 %v2055, %v2210
  %v2376 = vadd.f32 %v2056, %v2215
  %v2377 = vadd.f32 %v2057, %v2215
  %v2378 = vadd.f32 %v2058, %v2220
  %v2379 = vadd.f32 %v2059, %v2220
  %v2380 = vadd.f32 %v2060, %v2225
  %v2381 = vadd.f32 %v2061, %v2225
  %v2382 = vadd.f32 %v2062, %v2230
  %v2383 = vadd.f32 %v2063, %v2230
  %v2384 = vadd.f32 %v2064, %v2235
  %v2385 = vadd.f32 %v2065, %v2235
  %v2386 = vadd.f32 %v2066, %v2240
  %v2387 = vadd.f32 %v2067, %v2240
  %v2388 = vadd.f32 %v2068, %v2245
  %v2389 = vadd.f32 %v2069, %v2245
  %v2390 = vadd.f32 %v2070, %v2250
  %v2391 = vadd.f32 %v2071, %v2250
  %v2392 = vadd.f32 %v2072, %v2255
  %v2393 = vadd.f32 %v2073, %v2255
  %v2394 = vadd.f32 %v2074, %v2260
  %v2395 = vadd.f32 %v2075, %v2260
  %v2396 = vadd.f32 %v2076, %v2265
  %v2397 = vadd.f32 %v2077, %v2265
  %v2398 = vadd.f32 %v2078, %v2270
  %v2399 = vadd.f32 %v2079, %v2270
  %v2400 = vadd.f32 %v2080, %v2275
  %v2401 = vadd.f32 %v2081, %v2275
  %v2402 = vadd.f32 %v2082, %v2280
  %v2403 = vadd.f32 %v2083, %v2280
  %v2404 = vadd.f32 %v2084, %v2285
  %v2405 = vadd.f32 %v2085, %v2285
  %v2406 = vadd.f32 %v2086, %v2290
  %v2407 = vadd.f32 %v2087, %v2290
  %v2408 = vadd.f32 %v2088, %v2295
  %v2409 = vadd.f32 %v2089, %v2295
  %v2410 = vadd.f32 %v2090, %v2300
  %v2411 = vadd.f32 %v2091, %v2300
  %v2412 = vadd.f32 %v2092, %v2305
  %v2413 = vadd.f32 %v2093, %v2305
  %v2414 = vadd.f32 %v2094, %v2310
  %v2415 = vadd.f32 %v2095, %v2310
  %v2416 = vadd.f32 %v2096, %v2315
  %v2417 = vadd.f32 %v2097, %v2315
  %v2418 = vadd.f32 %v2098, %v2320
  %v2419 = vadd.f32 %v2099, %v2320
  %v2420 = vadd.f32 %v2100, %v2325
  %v2421 = vadd.f32 %v2101, %v2325
  %v2422 = vadd.f32 %v2102, %v2330
  %v2423 = vadd.f32 %v2103, %v2330
  %v2424 = vadd.f32 %v2104, %v2335
  %v2425 = vadd.f32 %v2105, %v2335
  %v2426 = vadd.f32 %v2106, %v2340
  %v2427 = vadd.f32 %v2107, %v2340
  %v2428 = vadd.f32 %v2108, %v2345
  %v2429 = vadd.f32 %v2109, %v2345
  %v2430 = vadd.f32 %v2110, %v2350
  %v2431 = vadd.f32 %v2111, %v2350
  %2432 = vst [vmem:[%s5] sm:$0xff] %v2352
  %2433 = vst.msk [vmem:[%s5 + $0x8] sm:$0xff] %vm951, %v2353
  %2434 = vst [vmem:[%s5 + $0x10] sm:$0xff] %v2354
  %2435 = vst.msk [vmem:[%s5 + $0x18] sm:$0xff] %vm951, %v2355
  %2436 = vst [vmem:[%s5 + $0x20] sm:$0xff] %v2356
  %2437 = vst.msk [vmem:[%s5 + $0x28] sm:$0xff] %vm951, %v2357
  %2438 = vst [vmem:[%s5 + $0x30] sm:$0xff] %v2358
  %2439 = vst.msk [vmem:[%s5 + $0x38] sm:$0xff] %vm951, %v2359
  %2440 = vst [vmem:[%s5 + $0x40] sm:$0xff] %v2360
  %2441 = vst.msk [vmem:[%s5 + $0x48] sm:$0xff] %vm951, %v2361
  %2442 = vst [vmem:[%s5 + $0x50] sm:$0xff] %v2362
  %2443 = vst.msk [vmem:[%s5 + $0x58] sm:$0xff] %vm951, %v2363
  %2444 = vst [vmem:[%s5 + $0x60] sm:$0xff] %v2364
  %2445 = vst.msk [vmem:[%s5 + $0x68] sm:$0xff] %vm951, %v2365
  %2446 = vst [vmem:[%s5 + $0x70] sm:$0xff] %v2366
  %2447 = vst.msk [vmem:[%s5 + $0x78] sm:$0xff] %vm951, %v2367
  %2448 = vst [vmem:[%s5 + $0x80] sm:$0xff] %v2368
  %2449 = vst.msk [vmem:[%s5 + $0x88] sm:$0xff] %vm951, %v2369
  %2450 = vst [vmem:[%s5 + $0x90] sm:$0xff] %v2370
  %2451 = vst.msk [vmem:[%s5 + $0x98] sm:$0xff] %vm951, %v2371
  %2452 = vst [vmem:[%s5 + $0xa0] sm:$0xff] %v2372
  %2453 = vst.msk [vmem:[%s5 + $0xa8] sm:$0xff] %vm951, %v2373
  %2454 = vst [vmem:[%s5 + $0xb0] sm:$0xff] %v2374
  %2455 = vst.msk [vmem:[%s5 + $0xb8] sm:$0xff] %vm951, %v2375
  %2456 = vst [vmem:[%s5 + $0xc0] sm:$0xff] %v2376
  %2457 = vst.msk [vmem:[%s5 + $0xc8] sm:$0xff] %vm951, %v2377
  %2458 = vst [vmem:[%s5 + $0xd0] sm:$0xff] %v2378
  %2459 = vst.msk [vmem:[%s5 + $0xd8] sm:$0xff] %vm951, %v2379
  %2460 = vst [vmem:[%s5 + $0xe0] sm:$0xff] %v2380
  %2461 = vst.msk [vmem:[%s5 + $0xe8] sm:$0xff] %vm951, %v2381
  %2462 = vst [vmem:[%s5 + $0xf0] sm:$0xff] %v2382
  %2463 = vst.msk [vmem:[%s5 + $0xf8] sm:$0xff] %vm951, %v2383
  %2464 = vst [vmem:[%s5 + $0x100] sm:$0xff] %v2384
  %2465 = vst.msk [vmem:[%s5 + $0x108] sm:$0xff] %vm951, %v2385
  %2466 = vst [vmem:[%s5 + $0x110] sm:$0xff] %v2386
  %2467 = vst.msk [vmem:[%s5 + $0x118] sm:$0xff] %vm951, %v2387
  %2468 = vst [vmem:[%s5 + $0x120] sm:$0xff] %v2388
  %2469 = vst.msk [vmem:[%s5 + $0x128] sm:$0xff] %vm951, %v2389
  %2470 = vst [vmem:[%s5 + $0x130] sm:$0xff] %v2390
  %2471 = vst.msk [vmem:[%s5 + $0x138] sm:$0xff] %vm951, %v2391
  %2472 = vst [vmem:[%s5 + $0x140] sm:$0xff] %v2392
  %2473 = vst.msk [vmem:[%s5 + $0x148] sm:$0xff] %vm951, %v2393
  %2474 = vst [vmem:[%s5 + $0x150] sm:$0xff] %v2394
  %2475 = vst.msk [vmem:[%s5 + $0x158] sm:$0xff] %vm951, %v2395
  %2476 = vst [vmem:[%s5 + $0x160] sm:$0xff] %v2396
  %2477 = vst.msk [vmem:[%s5 + $0x168] sm:$0xff] %vm951, %v2397
  %2478 = vst [vmem:[%s5 + $0x170] sm:$0xff] %v2398
  %2479 = vst.msk [vmem:[%s5 + $0x178] sm:$0xff] %vm951, %v2399
  %2480 = vst [vmem:[%s5 + $0x180] sm:$0xff] %v2400
  %2481 = vst.msk [vmem:[%s5 + $0x188] sm:$0xff] %vm951, %v2401
  %2482 = vst [vmem:[%s5 + $0x190] sm:$0xff] %v2402
  %2483 = vst.msk [vmem:[%s5 + $0x198] sm:$0xff] %vm951, %v2403
  %2484 = vst [vmem:[%s5 + $0x1a0] sm:$0xff] %v2404
  %2485 = vst.msk [vmem:[%s5 + $0x1a8] sm:$0xff] %vm951, %v2405
  %2486 = vst [vmem:[%s5 + $0x1b0] sm:$0xff] %v2406
  %2487 = vst.msk [vmem:[%s5 + $0x1b8] sm:$0xff] %vm951, %v2407
  %2488 = vst [vmem:[%s5 + $0x1c0] sm:$0xff] %v2408
  %2489 = vst.msk [vmem:[%s5 + $0x1c8] sm:$0xff] %vm951, %v2409
  %2490 = vst [vmem:[%s5 + $0x1d0] sm:$0xff] %v2410
  %2491 = vst.msk [vmem:[%s5 + $0x1d8] sm:$0xff] %vm951, %v2411
  %2492 = vst [vmem:[%s5 + $0x1e0] sm:$0xff] %v2412
  %2493 = vst.msk [vmem:[%s5 + $0x1e8] sm:$0xff] %vm951, %v2413
  %2494 = vst [vmem:[%s5 + $0x1f0] sm:$0xff] %v2414
  %2495 = vst.msk [vmem:[%s5 + $0x1f8] sm:$0xff] %vm951, %v2415
  %2496 = vst [vmem:[%s5 + $0x200] sm:$0xff] %v2416
  %2497 = vst.msk [vmem:[%s5 + $0x208] sm:$0xff] %vm951, %v2417
  %2498 = vst [vmem:[%s5 + $0x210] sm:$0xff] %v2418
  %2499 = vst.msk [vmem:[%s5 + $0x218] sm:$0xff] %vm951, %v2419
  %2500 = vst [vmem:[%s5 + $0x220] sm:$0xff] %v2420
  %2501 = vst.msk [vmem:[%s5 + $0x228] sm:$0xff] %vm951, %v2421
  %2502 = vst [vmem:[%s5 + $0x230] sm:$0xff] %v2422
  %2503 = vst.msk [vmem:[%s5 + $0x238] sm:$0xff] %vm951, %v2423
  %2504 = vst [vmem:[%s5 + $0x240] sm:$0xff] %v2424
  %2505 = vst.msk [vmem:[%s5 + $0x248] sm:$0xff] %vm951, %v2425
  %2506 = vst [vmem:[%s5 + $0x250] sm:$0xff] %v2426
  %2507 = vst.msk [vmem:[%s5 + $0x258] sm:$0xff] %vm951, %v2427
  %2508 = vst [vmem:[%s5 + $0x260] sm:$0xff] %v2428
  %2509 = vst.msk [vmem:[%s5 + $0x268] sm:$0xff] %vm951, %v2429
  %2510 = vst [vmem:[%s5 + $0x270] sm:$0xff] %v2430
  %2511 = vst.msk [vmem:[%s5 + $0x278] sm:$0xff] %vm951, %v2431
  // Predicated region
  $region22: #{conv_bn_add.1} parent=0 // pred_check
    _
  $region23: #{conv_bn_add.1} parent=0 // pred_check_branch
    %2513 = sbr.rel (0) target = $region25
  $region24: #{conv_bn_add.1} parent=0 // pred_region
    _
  $region25: #{conv_bn_add.1} parent=0 // pred_fallthru
    _
  // Predicated region
  $region26: #{conv_bn_add.1} parent=0 // pred_check
    _
  $region27: #{conv_bn_add.1} parent=0 // pred_check_branch
    %2515 = sbr.rel (0) target = $region29
  $region28: #{conv_bn_add.1} parent=0 // pred_region
    _
  $region29: #{conv_bn_add.1} parent=0 // pred_fallthru
    _

</llo_original>
